<compile_context>
chip_gen: v7x
topology: tpu7x:2x2x1
jax: 0.10.0
libtpu: 0.0.40
codegen_flags: <defaults>
</compile_context>

<pallas_src>
import functools
import math

import numpy as np
import jax
import jax.numpy as jnp
from jax import lax
from jax.experimental import pallas as pl
from jax.experimental.pallas import tpu as pltpu


def _pick_lane_tile(total, max_tile=2048):
    """Largest multiple-of-128 divisor of `total` that is <= max_tile (else total)."""
    if total % 128 != 0:
        return total
    t = min(max_tile, total)
    t = (t // 128) * 128
    while t > 128 and total % t != 0:
        t -= 128
    return t if (t > 0 and total % t == 0) else total


# ----------------------------------------------------------------------------
# K1: fused 1x1 convs (embed+conf in one matmul, guide in a second) + X build
#     Tiled along the folded (batch * pixel) lane axis; weights pinned.
# ----------------------------------------------------------------------------
def _embed_and_scale_kernel(feat_ref, guide_ref, wec_ref, wg_ref, x_ref, eg_ref, *, s_att):
    feat = feat_ref[...]                                                    # (Cin, T) f32
    ec = jnp.dot(wec_ref[...], feat, preferred_element_type=jnp.float32)    # (Ce+1, T)
    ce = wec_ref.shape[0] - 1
    cin = feat_ref.shape[0]
    # exact sigmoid (review correctness note: no approx reciprocal here)
    conf = 1.0 / (1.0 + jnp.exp(-ec[ce:ce + 1, :]))                         # (1, T)
    # pre-scaled filter input X = [feat*conf; conf] * exp(-beta^2)
    x_ref[:cin, :] = feat * conf * s_att
    x_ref[cin:cin + 1, :] = conf * s_att
    # guide 1x1 conv; embed + guide_embed concatenated for the edge-weight kernel
    ge = jnp.dot(wg_ref[...], guide_ref[...], preferred_element_type=jnp.float32)
    eg_ref[:ce, :] = ec[:ce, :]
    eg_ref[ce:, :] = ge


def embed_and_scale(feat2, guide2, w_ec, w_g, *, s_att, tbn):
    cin, bn = feat2.shape
    cg = guide2.shape[0]
    cep1 = w_ec.shape[0]
    ce = cep1 - 1
    cge = w_g.shape[0]
    kern = functools.partial(_embed_and_scale_kernel, s_att=s_att)
    return pl.pallas_call(
        kern,
        out_shape=(jax.ShapeDtypeStruct((cin + 1, bn), jnp.float32),
                   jax.ShapeDtypeStruct((ce + cge, bn), jnp.float32)),
        grid=(bn // tbn,),
        in_specs=[
            pl.BlockSpec((cin, tbn), lambda i: (0, i)),
            pl.BlockSpec((cg, tbn), lambda i: (0, i)),
            pl.BlockSpec((cep1, cin), lambda i: (0, 0)),   # weights pinned
            pl.BlockSpec((cge, cg), lambda i: (0, 0)),
        ],
        out_specs=(pl.BlockSpec((cin + 1, tbn), lambda i: (0, i)),
                   pl.BlockSpec((ce + cge, tbn), lambda i: (0, i))),
        compiler_params=pltpu.CompilerParams(dimension_semantics=("parallel",)),
    )(feat2, guide2, w_ec, w_g)


# ----------------------------------------------------------------------------
# K2: per-edge weight  exp(-(||d_embed||^2 + ||d_guide||^2)) * exp(-beta^2)
#     Computed in natural vertex order (self vs. parent), lane-tiled.
# ----------------------------------------------------------------------------
def _edge_weight_kernel(s_ref, p_ref, o_ref, *, s_att):
    d = s_ref[...] - p_ref[...]                                  # (Ce+Cge, T)
    dist = jnp.sum(d * d, axis=0, keepdims=True)                 # (1, T)
    o_ref[...] = jnp.exp(-dist) * s_att                          # single EUP exp


def edge_weights(eg_s, eg_p, *, s_att, tbn):
    ct, bn = eg_s.shape
    kern = functools.partial(_edge_weight_kernel, s_att=s_att)
    return pl.pallas_call(
        kern,
        out_shape=jax.ShapeDtypeStruct((1, bn), jnp.float32),
        grid=(bn // tbn,),
        in_specs=[pl.BlockSpec((ct, tbn), lambda i: (0, i)),
                  pl.BlockSpec((ct, tbn), lambda i: (0, i))],
        out_specs=pl.BlockSpec((1, tbn), lambda i: (0, i)),
        compiler_params=pltpu.CompilerParams(dimension_semantics=("parallel",)),
    )(eg_s, eg_p)


# ----------------------------------------------------------------------------
# K3 (fused filter core): two-pass tree aggregation + normalization + residual
#
#   up[v]   = x[v] + sum_{children c} w_c * up[c]            (reverse add order)
#   down[r] = up[r]
#   down[v] = up[v] + w_v * (down[parent] - w_v * up[v])      (add order)
#   => down[v] = sum_i x[i] * M[i, v]   with M the path-product matrix.
#
#   Per step: one SMEM scalar triple (v, parent, w) and two dynamic-sublane
#   (1, C+1) row reads + one row write on a VMEM accumulator — O(C) traffic.
# ----------------------------------------------------------------------------
def _tree_filter_kernel(ord_ref, par_ref, w_ref, x_ref, res_ref, o_ref, acc_sc,
                        *, gamma, eps):
    n, cp1 = acc_sc.shape
    c = cp1 - 1
    b = pl.program_id(0)
    base = b * n

    # init: acc[v] = x[v] = [feat*conf; conf] * exp(-beta^2) per pixel
    acc_sc[...] = x_ref[...]

    # ---- upward pass: children before parents (reverse tree-add order) ----
    def up_body(i, carry):
        k = n - i                           # k = n-1 ... 1
        v = ord_ref[base + k]
        p = par_ref[base + k]
        w = w_ref[base + k]                 # SMEM f32 scalar -> sreg broadcast
        acc_sc[pl.ds(p, 1), :] = acc_sc[pl.ds(p, 1), :] + w * acc_sc[pl.ds(v, 1), :]
        return carry

    lax.fori_loop(1, n, up_body, 0)

    # ---- downward pass: parents before children (tree-add order) ----
    def down_body(k, carry):
        v = ord_ref[base + k]
        p = par_ref[base + k]
        w = w_ref[base + k]
        av = acc_sc[pl.ds(v, 1), :]
        ap = acc_sc[pl.ds(p, 1), :]
        acc_sc[pl.ds(v, 1), :] = av + w * (ap - w * av)
        return carry

    lax.fori_loop(1, n, down_body, 0)

    a = acc_sc[...]                         # (N, C+1): per pixel j, sum_i x[i]*M[i,j]
    filt_feat = a[:, :c]
    filt_conf = a[:, c:c + 1]
    # exact division on the normalization path (review correctness note)
    o_ref[...] = gamma * filt_feat / (eps + filt_conf) + res_ref[...]


def tree_filter_core(order_flat, par_flat, w_flat, x_t, res_t, *, gamma, eps):
    bsz, n, cp1 = x_t.shape
    c = cp1 - 1
    kern = functools.partial(_tree_filter_kernel, gamma=gamma, eps=eps)
    return pl.pallas_call(
        kern,
        out_shape=jax.ShapeDtypeStruct((bsz, n, c), jnp.float32),
        grid_spec=pltpu.PrefetchScalarGridSpec(
            num_scalar_prefetch=2,                               # order, parent (int32, SMEM)
            grid=(bsz,),
            in_specs=[
                pl.BlockSpec(memory_space=pltpu.MemorySpace.SMEM),        # edge weights (B*N,) f32
                pl.BlockSpec((None, n, cp1), lambda b, o, p: (b, 0, 0)),  # X, pixel-major
                pl.BlockSpec((None, n, c), lambda b, o, p: (b, 0, 0)),    # residual, pixel-major
            ],
            out_specs=pl.BlockSpec((None, n, c), lambda b, o, p: (b, 0, 0)),
            scratch_shapes=[pltpu.VMEM((n, cp1), jnp.float32)],
        ),
        compiler_params=pltpu.CompilerParams(
            dimension_semantics=("parallel",),                   # batches across v7x cores
            vmem_limit_bytes=32 * 1024 * 1024),
    )(order_flat, par_flat, w_flat, x_t, res_t)


# ----------------------------------------------------------------------------
# Plain-JAX glue: pooling, sparse Prim's MST
# ----------------------------------------------------------------------------
def adaptive_avg_pool2d(x, out_hw):
    b, c, hin, win = x.shape
    ho, wo = out_hw
    assert hin % ho == 0 and win % wo == 0
    x = x.reshape(b, c, ho, hin // ho, wo, win // wo)
    return x.mean(axis=(3, 5))


def grid_neighbors(h, w):
    n = h * w
    ii = np.arange(n)
    r, c = ii // w, ii % w
    cand = np.stack([ii - w, ii + w, ii - 1, ii + 1], axis=1)
    valid = np.stack([r > 0, r < h - 1, c > 0, c < w - 1], axis=1)
    nbr = np.where(valid, cand, ii[:, None]).astype(np.int32)
    return jnp.asarray(nbr), jnp.asarray(valid)


def prim_mst_sparse(w_nbr, nbr):
    """Prim's MST on the 4-neighbour grid graph.

    Returns (parent, order): tree parent per vertex and the vertex-add order
    (parent always precedes child).  Weights are squared guide distances: the
    reference uses exp(||d||^2), a monotone map, so the MST is identical."""
    n = nbr.shape[0]
    in_tree = jnp.zeros((n,), jnp.bool_).at[0].set(True)
    min_cost = jnp.full((n,), jnp.inf, jnp.float32).at[nbr[0]].min(w_nbr[0])
    min_par = jnp.zeros((n,), jnp.int32)
    parent = jnp.zeros((n,), jnp.int32)
    order = jnp.zeros((n,), jnp.int32)

    def body(k, carry):
        in_tree, min_cost, min_par, parent, order = carry
        masked = jnp.where(in_tree, jnp.inf, min_cost)
        v = jnp.argmin(masked).astype(jnp.int32)
        parent = parent.at[v].set(min_par[v])
        order = order.at[k].set(v)
        in_tree = in_tree.at[v].set(True)
        nb = nbr[v]
        nw = w_nbr[v]
        cur = min_cost[nb]
        better = nw < cur
        min_cost = min_cost.at[nb].set(jnp.where(better, nw, cur))
        min_par = min_par.at[nb].set(jnp.where(better, v, min_par[nb]))
        return in_tree, min_cost, min_par, parent, order

    carry = lax.fori_loop(1, n, body, (in_tree, min_cost, min_par, parent, order))
    return carry[3], carry[4]


# ----------------------------------------------------------------------------
# TreeFilterV2 forward
# ----------------------------------------------------------------------------
def tree_filter_v2_forward(feature, guide, *, w_embed, w_conf, w_guide,
                           beta, gamma, eps):
    B, C, H, W = feature.shape
    N = H * W
    BN = B * N
    Ce = w_embed.shape[0]
    s_att = math.exp(-(beta ** 2))          # self weight exp(-beta^2), spatially constant

    feat_flat = feature.reshape(B, C, N).astype(jnp.float32)           # (B, C, N)
    feat2 = jnp.transpose(feat_flat, (1, 0, 2)).reshape(C, BN)         # (C, B*N)

    guide_pooled = adaptive_avg_pool2d(guide.astype(jnp.float32), (H, W))
    Cg = guide.shape[1]
    guide2 = jnp.transpose(guide_pooled.reshape(B, Cg, N), (1, 0, 2)).reshape(Cg, BN)

    tbn = _pick_lane_tile(BN)

    # K1: fused embed+conf conv, guide conv, sigmoid, X = [feat*conf; conf]*exp(-b^2)
    w_ec = jnp.concatenate([w_embed, w_conf], axis=0)                  # (Ce+1, C)
    x, eg = embed_and_scale(feat2, guide2, w_ec, w_guide, s_att=s_att, tbn=tbn)

    # MST over the 4-connected grid, weights = squared guide-embedding distance
    ge = eg[Ce:, :].reshape(-1, B, N).transpose(1, 0, 2)               # (B, Cge, N)
    nbr, valid = grid_neighbors(H, W)
    d = ge[:, :, :, None] - ge[:, :, nbr]
    w_nbr = jnp.sum(d * d, axis=1)                                     # (B, N, 4)
    w_nbr = jnp.where(valid[None], w_nbr, jnp.inf)
    parent, order = jax.vmap(lambda wv: prim_mst_sparse(wv, nbr))(w_nbr)   # (B, N) each

    # K2: learnable edge weights in natural vertex order (one parent-side gather)
    base = (jnp.arange(B, dtype=jnp.int32) * N)[:, None]
    par_flat_nat = (parent + base).reshape(-1)
    eg_p = jnp.take(eg, par_flat_nat, axis=1)
    w_nat = edge_weights(eg, eg_p, s_att=s_att, tbn=tbn)               # (1, B*N)

    # Reorder only the small per-vertex scalars into tree-add order.
    par_ord = jnp.take_along_axis(parent, order, axis=1)               # parent[order[k]]
    w_ord = jnp.take_along_axis(w_nat.reshape(B, N), order, axis=1)    # (B, N)

    # Pixel-major layouts for the per-pixel tree sweeps (cheap XLA transposes).
    cp1 = C + 1
    x_t = x.reshape(cp1, B, N).transpose(1, 2, 0)                      # (B, N, C+1)
    res_t = jnp.transpose(feat_flat, (0, 2, 1))                        # (B, N, C)

    out_t = tree_filter_core(
        order.reshape(-1).astype(jnp.int32),
        par_ord.reshape(-1).astype(jnp.int32),
        w_ord.reshape(-1).astype(jnp.float32),
        x_t, res_t, gamma=gamma, eps=eps)                              # (B, N, C)

    return jnp.transpose(out_t, (0, 2, 1)).reshape(B, C, H, W)


# ----------------------------------------------------------------------------
# Main
# ----------------------------------------------------------------------------
if __name__ == "__main__":
    key = jax.random.PRNGKey(0)
    B, C_in, H, W = 2, 8, 16, 16          # feature: (B, in_channels, H, W)
    Cg_in = 16                            # guide_channels
    Ce = 8                                # in_embed_channels
    Cge = 8                               # guide_embed_channels
    k1, k2, k3, k4, k5 = jax.random.split(key, 5)

    feature = jax.random.normal(k1, (B, C_in, H, W), jnp.float32)
    guide = jax.random.normal(k2, (B, Cg_in, 2 * H, 2 * W), jnp.float32)

    # Deterministic parameter init (shapes from TreeFilterV2.__init__).
    # NOTE: the module's reset_parameter() zeros conf/gamma/beta, which makes the
    # forward an exact identity; small non-zero values are used here so the whole
    # tree-filter path is actually exercised.
    w_embed = 0.01 * jax.random.normal(k3, (Ce, C_in), jnp.float32)
    w_guide = 0.01 * jax.random.normal(k4, (Cge, Cg_in), jnp.float32)
    w_conf = 0.01 * jax.random.normal(k5, (1, C_in), jnp.float32)
    beta = 0.1
    gamma = 0.5
    eps = 1e-8

    fwd = jax.jit(functools.partial(
        tree_filter_v2_forward,
        w_embed=w_embed, w_conf=w_conf, w_guide=w_guide,
        beta=beta, gamma=gamma, eps=eps))

    out = fwd(feature, guide)
    jax.block_until_ready(out)
    assert out.shape == feature.shape and out.dtype == jnp.float32
    assert bool(jnp.all(jnp.isfinite(out)))
    print("KERNEL_OK")
</pallas_src>

<mosaic_0001>
module attributes {stable_mosaic.version = 11 : i64} {
  func.func @_embed_and_scale_kernel(%arg0: i32, %arg1: memref<8x512xf32, #tpu.memory_space<vmem>>, %arg2: memref<16x512xf32, #tpu.memory_space<vmem>>, %arg3: memref<9x8xf32, #tpu.memory_space<vmem>>, %arg4: memref<8x16xf32, #tpu.memory_space<vmem>>, %arg5: memref<9x512xf32, #tpu.memory_space<vmem>>, %arg6: memref<16x512xf32, #tpu.memory_space<vmem>>) attributes {dimension_semantics = [#tpu.dimension_semantics<parallel>], iteration_bounds = array<i64: 1>, scalar_prefetch = 0 : i64, scratch_operands = 0 : i64, tpu.core_type = #tpu.core_type<tc>, window_params = [{transform_indices = @transform_0, window_bounds = array<i64: 8, 512>}, {transform_indices = @transform_1, window_bounds = array<i64: 16, 512>}, {pipeline_mode = #tpu.pipeline_mode<synchronous>, transform_indices = @transform_2, window_bounds = array<i64: 9, 8>}, {pipeline_mode = #tpu.pipeline_mode<synchronous>, transform_indices = @transform_3, window_bounds = array<i64: 8, 16>}, {transform_indices = @transform_4, window_bounds = array<i64: 9, 512>}, {transform_indices = @transform_5, window_bounds = array<i64: 16, 512>}]} {
    %c0 = arith.constant 0 : index
    %c0_0 = arith.constant 0 : index
    %0 = vector.load %arg1[%c0, %c0_0] : memref<8x512xf32, #tpu.memory_space<vmem>>, vector<8x512xf32>
    %c0_1 = arith.constant 0 : index
    %c0_2 = arith.constant 0 : index
    %1 = vector.load %arg3[%c0_1, %c0_2] : memref<9x8xf32, #tpu.memory_space<vmem>>, vector<9x8xf32>
    %cst = arith.constant dense<0.000000e+00> : vector<9x512xf32>
    %2 = tpu.matmul %1, %0, %cst {dimension_numbers = #tpu.dot_dimension_numbers<[1], [0], [0], [1], [0, 0, 1, 1], [], []>} : vector<9x8xf32>, vector<8x512xf32>, vector<9x512xf32> -> vector<9x512xf32>
    %3 = vector.extract_strided_slice %2 {offsets = [8, 0], sizes = [1, 512], strides = [1, 1]} : vector<9x512xf32> to vector<1x512xf32>
    %cst_3 = arith.constant 0.000000e+00 : f32
    %4 = vector.broadcast %cst_3 : f32 to vector<1x512xf32>
    %5 = arith.subf %4, %3 : vector<1x512xf32>
    %6 = math.exp %5 : vector<1x512xf32>
    %cst_4 = arith.constant 1.000000e+00 : f32
    %7 = vector.broadcast %cst_4 : f32 to vector<1x512xf32>
    %8 = arith.addf %7, %6 : vector<1x512xf32>
    %cst_5 = arith.constant 1.000000e+00 : f32
    %9 = vector.broadcast %cst_5 : f32 to vector<1x512xf32>
    %10 = arith.divf %9, %8 : vector<1x512xf32>
    %11 = vector.broadcast %10 : vector<1x512xf32> to vector<8x512xf32>
    %12 = arith.mulf %0, %11 : vector<8x512xf32>
    %cst_6 = arith.constant 0.990049839 : f32
    %13 = vector.broadcast %cst_6 : f32 to vector<8x512xf32>
    %14 = arith.mulf %12, %13 : vector<8x512xf32>
    %c0_7 = arith.constant 0 : index
    %c0_8 = arith.constant 0 : index
    %15 = vector.load %arg5[%c0_7, %c0_8] : memref<9x512xf32, #tpu.memory_space<vmem>>, vector<8x512xf32>
    tpu.vector_store %arg5[%c0_7, %c0_8], %14 {strides = array<i32>} : memref<9x512xf32, #tpu.memory_space<vmem>>, vector<8x512xf32>,
    %cst_9 = arith.constant 0.990049839 : f32
    %16 = vector.broadcast %cst_9 : f32 to vector<1x512xf32>
    %17 = arith.mulf %10, %16 : vector<1x512xf32>
    %c8 = arith.constant 8 : index
    %c0_10 = arith.constant 0 : index
    %18 = vector.load %arg5[%c8, %c0_10] : memref<9x512xf32, #tpu.memory_space<vmem>>, vector<1x512xf32>
    tpu.vector_store %arg5[%c8, %c0_10], %17 {strides = array<i32>} : memref<9x512xf32, #tpu.memory_space<vmem>>, vector<1x512xf32>,
    %c0_11 = arith.constant 0 : index
    %c0_12 = arith.constant 0 : index
    %19 = vector.load %arg4[%c0_11, %c0_12] : memref<8x16xf32, #tpu.memory_space<vmem>>, vector<8x16xf32>
    %c0_13 = arith.constant 0 : index
    %c0_14 = arith.constant 0 : index
    %20 = vector.load %arg2[%c0_13, %c0_14] : memref<16x512xf32, #tpu.memory_space<vmem>>, vector<16x512xf32>
    %cst_15 = arith.constant dense<0.000000e+00> : vector<8x512xf32>
    %21 = tpu.matmul %19, %20, %cst_15 {dimension_numbers = #tpu.dot_dimension_numbers<[1], [0], [0], [1], [0, 0, 1, 1], [], []>} : vector<8x16xf32>, vector<16x512xf32>, vector<8x512xf32> -> vector<8x512xf32>
    %22 = vector.extract_strided_slice %2 {offsets = [0, 0], sizes = [8, 512], strides = [1, 1]} : vector<9x512xf32> to vector<8x512xf32>
    %c0_16 = arith.constant 0 : index
    %c0_17 = arith.constant 0 : index
    %23 = vector.load %arg6[%c0_16, %c0_17] : memref<16x512xf32, #tpu.memory_space<vmem>>, vector<8x512xf32>
    tpu.vector_store %arg6[%c0_16, %c0_17], %22 {strides = array<i32>} : memref<16x512xf32, #tpu.memory_space<vmem>>, vector<8x512xf32>,
    %c8_18 = arith.constant 8 : index
    %c0_19 = arith.constant 0 : index
    %24 = vector.load %arg6[%c8_18, %c0_19] : memref<16x512xf32, #tpu.memory_space<vmem>>, vector<8x512xf32>
    tpu.vector_store %arg6[%c8_18, %c0_19], %21 {strides = array<i32>} : memref<16x512xf32, #tpu.memory_space<vmem>>, vector<8x512xf32>,
    return
  }
  func.func @transform_0(%arg0: i32) -> (i32, i32) {
    %c0_i32 = arith.constant 0 : i32
    %c0_i32_0 = arith.constant 0 : i32
    return %c0_i32, %arg0 : i32, i32
  }
  func.func @transform_1(%arg0: i32) -> (i32, i32) {
    %c0_i32 = arith.constant 0 : i32
    %c0_i32_0 = arith.constant 0 : i32
    return %c0_i32, %arg0 : i32, i32
  }
  func.func @transform_2(%arg0: i32) -> (i32, i32) {
    %c0_i32 = arith.constant 0 : i32
    %c0_i32_0 = arith.constant 0 : i32
    %c0_i32_1 = arith.constant 0 : i32
    return %c0_i32, %c0_i32_0 : i32, i32
  }
  func.func @transform_3(%arg0: i32) -> (i32, i32) {
    %c0_i32 = arith.constant 0 : i32
    %c0_i32_0 = arith.constant 0 : i32
    %c0_i32_1 = arith.constant 0 : i32
    return %c0_i32, %c0_i32_0 : i32, i32
  }
  func.func @transform_4(%arg0: i32) -> (i32, i32) {
    %c0_i32 = arith.constant 0 : i32
    %c0_i32_0 = arith.constant 0 : i32
    return %c0_i32, %arg0 : i32, i32
  }
  func.func @transform_5(%arg0: i32) -> (i32, i32) {
    %c0_i32 = arith.constant 0 : i32
    %c0_i32_0 = arith.constant 0 : i32
    return %c0_i32, %arg0 : i32, i32
  }
}

module attributes {stable_mosaic.version = 11 : i64} {
  func.func @_edge_weight_kernel(%arg0: i32, %arg1: memref<16x512xf32, #tpu.memory_space<vmem>>, %arg2: memref<16x512xf32, #tpu.memory_space<vmem>>, %arg3: memref<1x512xf32, #tpu.memory_space<vmem>>) attributes {dimension_semantics = [#tpu.dimension_semantics<parallel>], iteration_bounds = array<i64: 1>, scalar_prefetch = 0 : i64, scratch_operands = 0 : i64, tpu.core_type = #tpu.core_type<tc>, window_params = [{transform_indices = @transform_0, window_bounds = array<i64: 16, 512>}, {transform_indices = @transform_1, window_bounds = array<i64: 16, 512>}, {transform_indices = @transform_2, window_bounds = array<i64: 1, 512>}]} {
    %c0 = arith.constant 0 : index
    %c0_0 = arith.constant 0 : index
    %0 = vector.load %arg1[%c0, %c0_0] : memref<16x512xf32, #tpu.memory_space<vmem>>, vector<16x512xf32>
    %c0_1 = arith.constant 0 : index
    %c0_2 = arith.constant 0 : index
    %1 = vector.load %arg2[%c0_1, %c0_2] : memref<16x512xf32, #tpu.memory_space<vmem>>, vector<16x512xf32>
    %2 = arith.subf %0, %1 : vector<16x512xf32>
    %3 = arith.mulf %2, %2 : vector<16x512xf32>
    %cst = arith.constant dense<0.000000e+00> : vector<512xf32>
    %4 = vector.multi_reduction <add>, %3, %cst [0] : vector<16x512xf32> to vector<512xf32>
    %5 = vector.shape_cast %4 : vector<512xf32> to vector<1x512xf32>
    %cst_3 = arith.constant 0.000000e+00 : f32
    %6 = vector.broadcast %cst_3 : f32 to vector<1x512xf32>
    %7 = arith.subf %6, %5 : vector<1x512xf32>
    %8 = math.exp %7 : vector<1x512xf32>
    %cst_4 = arith.constant 0.990049839 : f32
    %9 = vector.broadcast %cst_4 : f32 to vector<1x512xf32>
    %10 = arith.mulf %8, %9 : vector<1x512xf32>
    %c0_5 = arith.constant 0 : index
    %c0_6 = arith.constant 0 : index
    %11 = vector.load %arg3[%c0_5, %c0_6] : memref<1x512xf32, #tpu.memory_space<vmem>>, vector<1x512xf32>
    tpu.vector_store %arg3[%c0_5, %c0_6], %10 {strides = array<i32>} : memref<1x512xf32, #tpu.memory_space<vmem>>, vector<1x512xf32>,
    return
  }
  func.func @transform_0(%arg0: i32) -> (i32, i32) {
    %c0_i32 = arith.constant 0 : i32
    %c0_i32_0 = arith.constant 0 : i32
    return %c0_i32, %arg0 : i32, i32
  }
  func.func @transform_1(%arg0: i32) -> (i32, i32) {
    %c0_i32 = arith.constant 0 : i32
    %c0_i32_0 = arith.constant 0 : i32
    return %c0_i32, %arg0 : i32, i32
  }
  func.func @transform_2(%arg0: i32) -> (i32, i32) {
    %c0_i32 = arith.constant 0 : i32
    %c0_i32_0 = arith.constant 0 : i32
    return %c0_i32, %arg0 : i32, i32
  }
}

module attributes {stable_mosaic.version = 11 : i64} {
  func.func @_tree_filter_kernel(%arg0: i32, %arg1: memref<512xi32, #tpu.memory_space<smem>>, %arg2: memref<512xi32, #tpu.memory_space<smem>>, %arg3: memref<512xf32, #tpu.memory_space<smem>>, %arg4: memref<1x256x9xf32, #tpu.memory_space<vmem>>, %arg5: memref<1x256x8xf32, #tpu.memory_space<vmem>>, %arg6: memref<1x256x8xf32, #tpu.memory_space<vmem>>, %arg7: memref<256x9xf32, #tpu.memory_space<vmem>>) attributes {dimension_semantics = [#tpu.dimension_semantics<parallel>], iteration_bounds = array<i64: 2>, scalar_prefetch = 2 : i64, scratch_operands = 1 : i64, tpu.core_type = #tpu.core_type<tc>, window_params = [{transform_indices = @transform_0, window_bounds = array<i64: 512>}, {transform_indices = @transform_1, window_bounds = array<i64: 1, 256, 9>}, {transform_indices = @transform_2, window_bounds = array<i64: 1, 256, 8>}, {transform_indices = @transform_3, window_bounds = array<i64: 1, 256, 8>}]} {
    %c256_i32 = arith.constant 256 : i32
    %0 = arith.muli %arg0, %c256_i32 : i32
    %c0 = arith.constant 0 : index
    %c0_0 = arith.constant 0 : index
    %c0_1 = arith.constant 0 : index
    %1 = vector.load %arg4[%c0, %c0_0, %c0_1] : memref<1x256x9xf32, #tpu.memory_space<vmem>>, vector<1x256x9xf32>
    %2 = vector.shape_cast %1 : vector<1x256x9xf32> to vector<256x9xf32>
    %c0_2 = arith.constant 0 : index
    %c0_3 = arith.constant 0 : index
    %3 = vector.load %arg7[%c0_2, %c0_3] : memref<256x9xf32, #tpu.memory_space<vmem>>, vector<256x9xf32>
    tpu.vector_store %arg7[%c0_2, %c0_3], %2 {strides = array<i32>} : memref<256x9xf32, #tpu.memory_space<vmem>>, vector<256x9xf32>,
    %c1_i32 = arith.constant 1 : i32
    %c255_i32 = arith.constant 255 : i32
    %4 = arith.addi %c1_i32, %c255_i32 : i32
    %c1_i32_4 = arith.constant 1 : i32
    scf.for %arg8 = %c1_i32 to %4 step %c1_i32_4  : i32 {
      %c256_i32_19 = arith.constant 256 : i32
      %21 = arith.subi %c256_i32_19, %arg8 : i32
      %22 = arith.addi %0, %21 : i32
      %23 = arith.index_cast %22 : i32 to index
      %24 = memref.load %arg1[%23] : memref<512xi32, #tpu.memory_space<smem>>
      %25 = arith.addi %0, %21 : i32
      %26 = arith.index_cast %25 : i32 to index
      %27 = memref.load %arg2[%26] : memref<512xi32, #tpu.memory_space<smem>>
      %28 = arith.addi %0, %21 : i32
      %29 = arith.index_cast %28 : i32 to index
      %30 = memref.load %arg3[%29] : memref<512xf32, #tpu.memory_space<smem>>
      %31 = arith.index_cast %27 : i32 to index
      %c0_20 = arith.constant 0 : index
      %32 = vector.load %arg7[%31, %c0_20] : memref<256x9xf32, #tpu.memory_space<vmem>>, vector<1x9xf32>
      %33 = arith.index_cast %24 : i32 to index
      %c0_21 = arith.constant 0 : index
      %34 = vector.load %arg7[%33, %c0_21] : memref<256x9xf32, #tpu.memory_space<vmem>>, vector<1x9xf32>
      %35 = vector.broadcast %30 : f32 to vector<1x9xf32>
      %36 = arith.mulf %35, %34 : vector<1x9xf32>
      %37 = arith.addf %32, %36 : vector<1x9xf32>
      %38 = arith.index_cast %27 : i32 to index
      %c0_22 = arith.constant 0 : index
      %39 = vector.load %arg7[%38, %c0_22] : memref<256x9xf32, #tpu.memory_space<vmem>>, vector<1x9xf32>
      tpu.vector_store %arg7[%38, %c0_22], %37 {strides = array<i32>} : memref<256x9xf32, #tpu.memory_space<vmem>>, vector<1x9xf32>,
    }
    %c255_i32_5 = arith.constant 255 : i32
    %c1_i32_6 = arith.constant 1 : i32
    %c255_i32_7 = arith.constant 255 : i32
    %5 = arith.addi %c1_i32_6, %c255_i32_7 : i32
    %c1_i32_8 = arith.constant 1 : i32
    scf.for %arg8 = %c1_i32_6 to %5 step %c1_i32_8  : i32 {
      %21 = arith.addi %0, %arg8 : i32
      %22 = arith.index_cast %21 : i32 to index
      %23 = memref.load %arg1[%22] : memref<512xi32, #tpu.memory_space<smem>>
      %24 = arith.addi %0, %arg8 : i32
      %25 = arith.index_cast %24 : i32 to index
      %26 = memref.load %arg2[%25] : memref<512xi32, #tpu.memory_space<smem>>
      %27 = arith.addi %0, %arg8 : i32
      %28 = arith.index_cast %27 : i32 to index
      %29 = memref.load %arg3[%28] : memref<512xf32, #tpu.memory_space<smem>>
      %30 = arith.index_cast %23 : i32 to index
      %c0_19 = arith.constant 0 : index
      %31 = vector.load %arg7[%30, %c0_19] : memref<256x9xf32, #tpu.memory_space<vmem>>, vector<1x9xf32>
      %32 = arith.index_cast %26 : i32 to index
      %c0_20 = arith.constant 0 : index
      %33 = vector.load %arg7[%32, %c0_20] : memref<256x9xf32, #tpu.memory_space<vmem>>, vector<1x9xf32>
      %34 = vector.broadcast %29 : f32 to vector<1x9xf32>
      %35 = arith.mulf %34, %31 : vector<1x9xf32>
      %36 = arith.subf %33, %35 : vector<1x9xf32>
      %37 = vector.broadcast %29 : f32 to vector<1x9xf32>
      %38 = arith.mulf %37, %36 : vector<1x9xf32>
      %39 = arith.addf %31, %38 : vector<1x9xf32>
      %40 = arith.index_cast %23 : i32 to index
      %c0_21 = arith.constant 0 : index
      %41 = vector.load %arg7[%40, %c0_21] : memref<256x9xf32, #tpu.memory_space<vmem>>, vector<1x9xf32>
      tpu.vector_store %arg7[%40, %c0_21], %39 {strides = array<i32>} : memref<256x9xf32, #tpu.memory_space<vmem>>, vector<1x9xf32>,
    }
    %c255_i32_9 = arith.constant 255 : i32
    %c0_10 = arith.constant 0 : index
    %c0_11 = arith.constant 0 : index
    %6 = vector.load %arg7[%c0_10, %c0_11] : memref<256x9xf32, #tpu.memory_space<vmem>>, vector<256x9xf32>
    %7 = vector.extract_strided_slice %6 {offsets = [0, 0], sizes = [256, 8], strides = [1, 1]} : vector<256x9xf32> to vector<256x8xf32>
    %8 = vector.extract_strided_slice %6 {offsets = [0, 8], sizes = [256, 1], strides = [1, 1]} : vector<256x9xf32> to vector<256x1xf32>
    %cst = arith.constant 5.000000e-01 : f32
    %9 = vector.broadcast %cst : f32 to vector<256x8xf32>
    %10 = arith.mulf %9, %7 : vector<256x8xf32>
    %cst_12 = arith.constant 9.99999993E-9 : f32
    %11 = vector.broadcast %cst_12 : f32 to vector<256x1xf32>
    %12 = arith.addf %11, %8 : vector<256x1xf32>
    %13 = vector.broadcast %12 : vector<256x1xf32> to vector<256x8xf32>
    %14 = arith.divf %10, %13 : vector<256x8xf32>
    %c0_13 = arith.constant 0 : index
    %c0_14 = arith.constant 0 : index
    %c0_15 = arith.constant 0 : index
    %15 = vector.load %arg5[%c0_13, %c0_14, %c0_15] : memref<1x256x8xf32, #tpu.memory_space<vmem>>, vector<1x256x8xf32>
    %16 = vector.shape_cast %15 : vector<1x256x8xf32> to vector<256x8xf32>
    %17 = arith.addf %14, %16 : vector<256x8xf32>
    %c0_16 = arith.constant 0 : index
    %c0_17 = arith.constant 0 : index
    %c0_18 = arith.constant 0 : index
    %18 = vector.load %arg6[%c0_16, %c0_17, %c0_18] : memref<1x256x8xf32, #tpu.memory_space<vmem>>, vector<1x256x8xf32>
    %19 = vector.shape_cast %18 : vector<1x256x8xf32> to vector<256x8xf32>
    %20 = vector.shape_cast %17 : vector<256x8xf32> to vector<1x256x8xf32>
    tpu.vector_store %arg6[%c0_16, %c0_17, %c0_18], %20 {strides = array<i32>} : memref<1x256x8xf32, #tpu.memory_space<vmem>>, vector<1x256x8xf32>,
    return
  }
  func.func @transform_0(%arg0: i32, %arg1: memref<512xi32, #tpu.memory_space<smem>>, %arg2: memref<512xi32, #tpu.memory_space<smem>>) -> i32 {
    %c0_i32 = arith.constant 0 : i32
    %c0_i32_0 = arith.constant 0 : i32
    return %c0_i32 : i32
  }
  func.func @transform_1(%arg0: i32, %arg1: memref<512xi32, #tpu.memory_space<smem>>, %arg2: memref<512xi32, #tpu.memory_space<smem>>) -> (i32, i32, i32) {
    %c0_i32 = arith.constant 0 : i32
    %c0_i32_0 = arith.constant 0 : i32
    %c0_i32_1 = arith.constant 0 : i32
    return %arg0, %c0_i32, %c0_i32_0 : i32, i32, i32
  }
  func.func @transform_2(%arg0: i32, %arg1: memref<512xi32, #tpu.memory_space<smem>>, %arg2: memref<512xi32, #tpu.memory_space<smem>>) -> (i32, i32, i32) {
    %c0_i32 = arith.constant 0 : i32
    %c0_i32_0 = arith.constant 0 : i32
    %c0_i32_1 = arith.constant 0 : i32
    return %arg0, %c0_i32, %c0_i32_0 : i32, i32, i32
  }
  func.func @transform_3(%arg0: i32, %arg1: memref<512xi32, #tpu.memory_space<smem>>, %arg2: memref<512xi32, #tpu.memory_space<smem>>) -> (i32, i32, i32) {
    %c0_i32 = arith.constant 0 : i32
    %c0_i32_0 = arith.constant 0 : i32
    %c0_i32_1 = arith.constant 0 : i32
    return %arg0, %c0_i32, %c0_i32_0 : i32, i32, i32
  }
}

</mosaic_0001>

<llo_original>
// kernel: tree_filter_v2_forward.3
$region0: #{tree_filter_v2_forward.3}
  #allocation0 [shape = 'u32[]', space=smem, size = 0x4, offset = 0x4, fixed_abs, tag = 'smem constant byte address 0x4 - core index']
  #allocation1 [shape = 'u32[144,128]{1,0:T(1,128)}', space=vmem, size = 0x12000, scoped, tag = 'internal scratch']
  %s0 = inlined_call_operand.vmem [shape: f32[8,512], index: 0, kind: input, shape index: {}]
  %s1 = inlined_call_operand.vmem [shape: f32[16,512], index: 1, kind: input, shape index: {}]
  %s2 = inlined_call_operand.vmem [shape: f32[9,8], index: 2, kind: input, shape index: {}]
  %s3 = inlined_call_operand.vmem [shape: f32[8,16], index: 3, kind: input, shape index: {}]
  %s4 = inlined_call_operand.vmem [shape: f32[9,512], index: 4, kind: output, shape index: {0}]
  %s5 = inlined_call_operand.vmem [shape: f32[16,512], index: 5, kind: output, shape index: {1}]
  %6 = xla_tuple %s4, %s5
  %s7 = sld [smem:[#allocation0]]
  $region34: #{tree_filter_v2_forward.3} parent=0
    _
  %s9 = ssub.s32 1, %s7
  %s10 = scalar_select 0, %s9, %s7
  // Predicated region
  $region2: #{tree_filter_v2_forward.3} parent=0 // pred_check
    _
  $region3: #{tree_filter_v2_forward.3} parent=0 // pred_check_branch
    %12 = sbr.rel (0) target = $region5
  $region4: #{tree_filter_v2_forward.3} parent=0 // pred_region
    _
  $region5: #{tree_filter_v2_forward.3} parent=0 // pred_fallthru
    _
  // Predicated region
  $region6: #{tree_filter_v2_forward.3} parent=0 // pred_check
    _
  $region7: #{tree_filter_v2_forward.3} parent=0 // pred_check_branch
    %14 = sbr.rel (0) target = $region9
  $region8: #{tree_filter_v2_forward.3} parent=0 // pred_region
    _
  $region9: #{tree_filter_v2_forward.3} parent=0 // pred_fallthru
    _
  // Predicated region
  $region10: #{tree_filter_v2_forward.3} parent=0 // pred_check
    _
  $region11: #{tree_filter_v2_forward.3} parent=0 // pred_check_branch
    %16 = sbr.rel (0) target = $region13
  $region12: #{tree_filter_v2_forward.3} parent=0 // pred_region
    _
  $region13: #{tree_filter_v2_forward.3} parent=0 // pred_fallthru
    _
  // Predicated region
  $region14: #{tree_filter_v2_forward.3} parent=0 // pred_check
    _
  $region15: #{tree_filter_v2_forward.3} parent=0 // pred_check_branch
    %18 = sbr.rel (0) target = $region17
  $region16: #{tree_filter_v2_forward.3} parent=0 // pred_region
    _
  $region17: #{tree_filter_v2_forward.3} parent=0 // pred_fallthru
    _
  %v19 = vld [vmem:[%s0] sm:$0xff]
  %v20 = vld [vmem:[%s0 + $0x8] sm:$0xff]
  %v21 = vld [vmem:[%s0 + $0x10] sm:$0xff]
  %v22 = vld [vmem:[%s0 + $0x18] sm:$0xff]
  %v23 = vld [vmem:[%s2] sm:$0xff]
  %v24 = vld [vmem:[%s2 + $0x8] sm:$0x1]
  %vm25 = vcmask 64512
  %v27 = vsel %vm25, %v23, 0
  %v30 = vsel %vm25, %v24, 0
  %32 = vmatprep.subr.mxu0 %v20
  %33 = vmatpush1.msra.mxu0 %v19
  %34 = vmatprep.subr.mxu0 0.0
  %35 = vmatpush1.msra.mxu0 0.0
  %36 = vmatprep.subr.mxu0 0.0
  %37 = vmatpush1.msra.mxu0 0.0
  %38 = vmatprep.subr.mxu0 0.0
  %39 = vmatpush1.msra.mxu0 0.0
  %40 = vmatprep.subr.mxu0 0.0
  %41 = vmatpush1.msra.mxu0 0.0
  %42 = vmatprep.subr.mxu0 0.0
  %43 = vmatpush1.msra.mxu0 0.0
  %44 = vmatprep.subr.mxu0 0.0
  %45 = vmatpush1.msra.mxu0 0.0
  %46 = vmatprep.subr.mxu0 0.0
  %47 = vmatpush1.msra.mxu0 0.0
  %48 = vmatprep.subr.mxu0 0.0
  %49 = vmatpush1.msra.mxu0 0.0
  %50 = vmatprep.subr.mxu0 0.0
  %51 = vmatpush1.msra.mxu0 0.0
  %52 = vmatprep.subr.mxu0 0.0
  %53 = vmatpush1.msra.mxu0 0.0
  %54 = vmatprep.subr.mxu0 0.0
  %55 = vmatpush1.msra.mxu0 0.0
  %56 = vmatprep.subr.mxu0 0.0
  %57 = vmatpush1.msra.mxu0 0.0
  %58 = vmatprep.subr.mxu0 0.0
  %59 = vmatpush1.msra.mxu0 0.0
  %60 = vmatprep.subr.mxu0 0.0
  %61 = vmatpush1.msra.mxu0 0.0
  %62 = vmatprep.subr.mxu0 0.0
  %63 = vmatpush1.msra.mxu0 0.0
  %64 = vmatprep.subr.mxu0 0.0
  %65 = vmatpush1.msra.mxu0 0.0
  %66 = vmatprep.subr.mxu0 0.0
  %67 = vmatpush1.msra.mxu0 0.0
  %68 = vmatprep.subr.mxu0 0.0
  %69 = vmatpush1.msra.mxu0 0.0
  %70 = vmatprep.subr.mxu0 0.0
  %71 = vmatpush1.msra.mxu0 0.0
  %72 = vmatprep.subr.mxu0 0.0
  %73 = vmatpush1.msra.mxu0 0.0
  %74 = vmatprep.subr.mxu0 0.0
  %75 = vmatpush1.msra.mxu0 0.0
  %76 = vmatprep.subr.mxu0 0.0
  %77 = vmatpush1.msra.mxu0 0.0
  %78 = vmatprep.subr.mxu0 0.0
  %79 = vmatpush1.msra.mxu0 0.0
  %80 = vmatprep.subr.mxu0 0.0
  %81 = vmatpush1.msra.mxu0 0.0
  %82 = vmatprep.subr.mxu0 0.0
  %83 = vmatpush1.msra.mxu0 0.0
  %84 = vmatprep.subr.mxu0 0.0
  %85 = vmatpush1.msra.mxu0 0.0
  %86 = vmatprep.subr.mxu0 0.0
  %87 = vmatpush1.msra.mxu0 0.0
  %88 = vmatprep.subr.mxu0 0.0
  %89 = vmatpush1.msra.mxu0 0.0
  %90 = vmatprep.subr.mxu0 0.0
  %91 = vmatpush1.msra.mxu0 0.0
  %92 = vmatprep.subr.mxu0 0.0
  %93 = vmatpush1.msra.mxu0 0.0
  %94 = vmatprep.subr.mxu0 0.0
  %95 = vmatpush1.msra.mxu0 0.0
  %96 = vmatprep.mubr.f32.mxu0 0.0
  %97 = vmatmul.mubr.f32.gmra.mrb[0].mxu0 %v27
  %v98 = vpop.f32.mrb[0].mxu0
  %v99 = vadd.f32 0.0, %v98
  %v100 = vpop.f32.mrb[0].mxu0
  %v101 = vadd.f32 0.0, %v100
  %102 = vmatprep.mubr.f32.mxu0 0.0
  %103 = vmatmul.mubr.f32.gmra.mrb[0].mxu0 %v30
  %v104 = vpop.f32.mrb[0].mxu0
  %v105 = vadd.f32 0.0, %v104
  %v106 = vpop.f32.mrb[0].mxu0
  %v107 = vadd.f32 0.0, %v106
  %108 = vdwg.mxu0
  %109 = vmatprep.subr.mxu0 %v22
  %110 = vmatpush1.msra.mxu0 %v21
  %111 = vmatprep.subr.mxu0 0.0
  %112 = vmatpush1.msra.mxu0 0.0
  %113 = vmatprep.subr.mxu0 0.0
  %114 = vmatpush1.msra.mxu0 0.0
  %115 = vmatprep.subr.mxu0 0.0
  %116 = vmatpush1.msra.mxu0 0.0
  %117 = vmatprep.subr.mxu0 0.0
  %118 = vmatpush1.msra.mxu0 0.0
  %119 = vmatprep.subr.mxu0 0.0
  %120 = vmatpush1.msra.mxu0 0.0
  %121 = vmatprep.subr.mxu0 0.0
  %122 = vmatpush1.msra.mxu0 0.0
  %123 = vmatprep.subr.mxu0 0.0
  %124 = vmatpush1.msra.mxu0 0.0
  %125 = vmatprep.subr.mxu0 0.0
  %126 = vmatpush1.msra.mxu0 0.0
  %127 = vmatprep.subr.mxu0 0.0
  %128 = vmatpush1.msra.mxu0 0.0
  %129 = vmatprep.subr.mxu0 0.0
  %130 = vmatpush1.msra.mxu0 0.0
  %131 = vmatprep.subr.mxu0 0.0
  %132 = vmatpush1.msra.mxu0 0.0
  %133 = vmatprep.subr.mxu0 0.0
  %134 = vmatpush1.msra.mxu0 0.0
  %135 = vmatprep.subr.mxu0 0.0
  %136 = vmatpush1.msra.mxu0 0.0
  %137 = vmatprep.subr.mxu0 0.0
  %138 = vmatpush1.msra.mxu0 0.0
  %139 = vmatprep.subr.mxu0 0.0
  %140 = vmatpush1.msra.mxu0 0.0
  %141 = vmatprep.subr.mxu0 0.0
  %142 = vmatpush1.msra.mxu0 0.0
  %143 = vmatprep.subr.mxu0 0.0
  %144 = vmatpush1.msra.mxu0 0.0
  %145 = vmatprep.subr.mxu0 0.0
  %146 = vmatpush1.msra.mxu0 0.0
  %147 = vmatprep.subr.mxu0 0.0
  %148 = vmatpush1.msra.mxu0 0.0
  %149 = vmatprep.subr.mxu0 0.0
  %150 = vmatpush1.msra.mxu0 0.0
  %151 = vmatprep.subr.mxu0 0.0
  %152 = vmatpush1.msra.mxu0 0.0
  %153 = vmatprep.subr.mxu0 0.0
  %154 = vmatpush1.msra.mxu0 0.0
  %155 = vmatprep.subr.mxu0 0.0
  %156 = vmatpush1.msra.mxu0 0.0
  %157 = vmatprep.subr.mxu0 0.0
  %158 = vmatpush1.msra.mxu0 0.0
  %159 = vmatprep.subr.mxu0 0.0
  %160 = vmatpush1.msra.mxu0 0.0
  %161 = vmatprep.subr.mxu0 0.0
  %162 = vmatpush1.msra.mxu0 0.0
  %163 = vmatprep.subr.mxu0 0.0
  %164 = vmatpush1.msra.mxu0 0.0
  %165 = vmatprep.subr.mxu0 0.0
  %166 = vmatpush1.msra.mxu0 0.0
  %167 = vmatprep.subr.mxu0 0.0
  %168 = vmatpush1.msra.mxu0 0.0
  %169 = vmatprep.subr.mxu0 0.0
  %170 = vmatpush1.msra.mxu0 0.0
  %171 = vmatprep.subr.mxu0 0.0
  %172 = vmatpush1.msra.mxu0 0.0
  %173 = vmatprep.mubr.f32.mxu0 0.0
  %174 = vmatmul.mubr.f32.gmra.mrb[0].mxu0 %v27
  %v175 = vpop.f32.mrb[0].mxu0
  %v176 = vadd.f32 0.0, %v175
  %v177 = vpop.f32.mrb[0].mxu0
  %v178 = vadd.f32 0.0, %v177
  %179 = vmatprep.mubr.f32.mxu0 0.0
  %180 = vmatmul.mubr.f32.gmra.mrb[0].mxu0 %v30
  %v181 = vpop.f32.mrb[0].mxu0
  %v182 = vadd.f32 0.0, %v181
  %v183 = vpop.f32.mrb[0].mxu0
  %v184 = vadd.f32 0.0, %v183
  %185 = vdwg.mxu0
  %v186 = vsub.f32 0.0, %v105
  %v187 = vsub.f32 0.0, %v107
  %v188 = vsub.f32 0.0, %v182
  %v189 = vsub.f32 0.0, %v184
  %v190 = vmul.f32 %v186, 1.442695
  %v191 = vpow.pop %v190
  %v192 = vmul.f32 %v187, 1.442695
  %v193 = vpow.pop %v192
  %v194 = vmul.f32 %v188, 1.442695
  %v195 = vpow.pop %v194
  %v196 = vmul.f32 %v189, 1.442695
  %v197 = vpow.pop %v196
  %v198 = vadd.f32 %v191, 1.0
  %v199 = vadd.f32 %v193, 1.0
  %v200 = vadd.f32 %v195, 1.0
  %v201 = vadd.f32 %v197, 1.0
  %v202 = vrcp.pop %v198
  %v203 = vmul.f32 1.0, %v202
  %v204 = vrcp.pop %v199
  %v205 = vmul.f32 1.0, %v204
  %v206 = vrcp.pop %v200
  %v207 = vmul.f32 1.0, %v206
  %v208 = vrcp.pop %v201
  %v209 = vmul.f32 1.0, %v208
  %v210 = vlaneseq
  %v211 = vshrl.u32 %v210, 7
  %v212 = vsub.s32 0, %v211
  %v213 = vrot.slane %v203, %v212
  %v214 = vlaneseq
  %v215 = vshrl.u32 %v214, 7
  %v216 = vsub.s32 0, %v215
  %v217 = vrot.slane %v205, %v216
  %v218 = vlaneseq
  %v219 = vshrl.u32 %v218, 7
  %v220 = vsub.s32 0, %v219
  %v221 = vrot.slane %v207, %v220
  %v222 = vlaneseq
  %v223 = vshrl.u32 %v222, 7
  %v224 = vsub.s32 0, %v223
  %v225 = vrot.slane %v209, %v224
  %v226 = vmul.f32 %v19, %v213
  %v227 = vmul.f32 %v20, %v217
  %v228 = vmul.f32 %v21, %v221
  %v229 = vmul.f32 %v22, %v225
  %v230 = vmul.f32 %v226, 0.99004984
  %v231 = vmul.f32 %v227, 0.99004984
  %v232 = vmul.f32 %v228, 0.99004984
  %v233 = vmul.f32 %v229, 0.99004984
  %234 = vst [vmem:[%s4] sm:$0xff] %v230
  %235 = vst [vmem:[%s4 + $0x8] sm:$0xff] %v231
  %236 = vst [vmem:[%s4 + $0x10] sm:$0xff] %v232
  %237 = vst [vmem:[%s4 + $0x18] sm:$0xff] %v233
  %v238 = vmul.f32 %v203, 0.99004984
  %v239 = vmul.f32 %v205, 0.99004984
  %v240 = vmul.f32 %v207, 0.99004984
  %v241 = vmul.f32 %v209, 0.99004984
  %v246 = vcombine.low %v238, %v239
  %v247 = vcombine.low %v240, %v241
  %v249 = vunpack.c.l.s4 1966171168
  %v250 = vunpack.c.0.s8 %v249
  %v251 = vlaneseq
  %v252 = vshrl.u32 %v251, 7
  %v253 = vsub.s32 %v250, %v252
  %v254 = vrot.slane %v246, %v253
  %v256 = vunpack.c.l.s4 1966171168
  %v257 = vunpack.c.0.s8 %v256
  %v258 = vlaneseq
  %v259 = vshrl.u32 %v258, 7
  %v260 = vsub.s32 %v257, %v259
  %v261 = vrot.slane %v247, %v260
  %v262 = vcombine.low %v254, %v261
  %v264 = vunpack.c.l.s4 1966171168
  %v265 = vunpack.c.0.s8 %v264
  %v266 = vlaneseq
  %v267 = vshrl.u32 %v266, 7
  %v268 = vsub.s32 %v265, %v267
  %v269 = vrot.slane %v262, %v268
  %v271 = vlaneseq
  %vm272 = vcmp.ge.s32.totalorder %v271, 0
  %vm273 = vcmp.lt.s32.totalorder %v271, 512
  %vm274 = vmand %vm272, %vm273
  %s275 = scalar_lea.vmem %s4, 32
  %276 = vst.msk [vmem:[%s275] ss:$8 sm:$0xf] %vm274, %v269
  %277 = vst.msk [vmem:[%s275] ss:$8 sm:$0x0] %vm274, %v269
  %v278 = vld [vmem:[%s3] sm:$0xff]
  %v279 = vld [vmem:[%s1] sm:$0xff]
  %v280 = vld [vmem:[%s1 + $0x8] sm:$0xff]
  %v281 = vld [vmem:[%s1 + $0x10] sm:$0xff]
  %v282 = vld [vmem:[%s1 + $0x18] sm:$0xff]
  %v283 = vld [vmem:[%s1 + $0x20] sm:$0xff]
  %v284 = vld [vmem:[%s1 + $0x28] sm:$0xff]
  %v285 = vld [vmem:[%s1 + $0x30] sm:$0xff]
  %v286 = vld [vmem:[%s1 + $0x38] sm:$0xff]
  %vm287 = vcmask 130048
  %v289 = vsel %vm287, %v278, 0
  %291 = vmatprep.subr.mxu0 %v280
  %292 = vmatpush1.msra.mxu0 %v279
  %293 = vmatprep.subr.mxu0 %v284
  %294 = vmatpush1.msra.mxu0 %v283
  %295 = vmatprep.subr.mxu0 0.0
  %296 = vmatpush1.msra.mxu0 0.0
  %297 = vmatprep.subr.mxu0 0.0
  %298 = vmatpush1.msra.mxu0 0.0
  %299 = vmatprep.subr.mxu0 0.0
  %300 = vmatpush1.msra.mxu0 0.0
  %301 = vmatprep.subr.mxu0 0.0
  %302 = vmatpush1.msra.mxu0 0.0
  %303 = vmatprep.subr.mxu0 0.0
  %304 = vmatpush1.msra.mxu0 0.0
  %305 = vmatprep.subr.mxu0 0.0
  %306 = vmatpush1.msra.mxu0 0.0
  %307 = vmatprep.subr.mxu0 0.0
  %308 = vmatpush1.msra.mxu0 0.0
  %309 = vmatprep.subr.mxu0 0.0
  %310 = vmatpush1.msra.mxu0 0.0
  %311 = vmatprep.subr.mxu0 0.0
  %312 = vmatpush1.msra.mxu0 0.0
  %313 = vmatprep.subr.mxu0 0.0
  %314 = vmatpush1.msra.mxu0 0.0
  %315 = vmatprep.subr.mxu0 0.0
  %316 = vmatpush1.msra.mxu0 0.0
  %317 = vmatprep.subr.mxu0 0.0
  %318 = vmatpush1.msra.mxu0 0.0
  %319 = vmatprep.subr.mxu0 0.0
  %320 = vmatpush1.msra.mxu0 0.0
  %321 = vmatprep.subr.mxu0 0.0
  %322 = vmatpush1.msra.mxu0 0.0
  %323 = vmatprep.subr.mxu0 0.0
  %324 = vmatpush1.msra.mxu0 0.0
  %325 = vmatprep.subr.mxu0 0.0
  %326 = vmatpush1.msra.mxu0 0.0
  %327 = vmatprep.subr.mxu0 0.0
  %328 = vmatpush1.msra.mxu0 0.0
  %329 = vmatprep.subr.mxu0 0.0
  %330 = vmatpush1.msra.mxu0 0.0
  %331 = vmatprep.subr.mxu0 0.0
  %332 = vmatpush1.msra.mxu0 0.0
  %333 = vmatprep.subr.mxu0 0.0
  %334 = vmatpush1.msra.mxu0 0.0
  %335 = vmatprep.subr.mxu0 0.0
  %336 = vmatpush1.msra.mxu0 0.0
  %337 = vmatprep.subr.mxu0 0.0
  %338 = vmatpush1.msra.mxu0 0.0
  %339 = vmatprep.subr.mxu0 0.0
  %340 = vmatpush1.msra.mxu0 0.0
  %341 = vmatprep.subr.mxu0 0.0
  %342 = vmatpush1.msra.mxu0 0.0
  %343 = vmatprep.subr.mxu0 0.0
  %344 = vmatpush1.msra.mxu0 0.0
  %345 = vmatprep.subr.mxu0 0.0
  %346 = vmatpush1.msra.mxu0 0.0
  %347 = vmatprep.subr.mxu0 0.0
  %348 = vmatpush1.msra.mxu0 0.0
  %349 = vmatprep.subr.mxu0 0.0
  %350 = vmatpush1.msra.mxu0 0.0
  %351 = vmatprep.subr.mxu0 0.0
  %352 = vmatpush1.msra.mxu0 0.0
  %353 = vmatprep.subr.mxu0 0.0
  %354 = vmatpush1.msra.mxu0 0.0
  %355 = vmatprep.mubr.f32.mxu0 0.0
  %356 = vmatmul.mubr.f32.gmra.mrb[0].mxu0 %v289
  %v357 = vpop.f32.mrb[0].mxu0
  %v358 = vadd.f32 0.0, %v357
  %v359 = vpop.f32.mrb[0].mxu0
  %v360 = vadd.f32 0.0, %v359
  %361 = vdwg.mxu0
  %362 = vmatprep.subr.mxu0 %v282
  %363 = vmatpush1.msra.mxu0 %v281
  %364 = vmatprep.subr.mxu0 %v286
  %365 = vmatpush1.msra.mxu0 %v285
  %366 = vmatprep.subr.mxu0 0.0
  %367 = vmatpush1.msra.mxu0 0.0
  %368 = vmatprep.subr.mxu0 0.0
  %369 = vmatpush1.msra.mxu0 0.0
  %370 = vmatprep.subr.mxu0 0.0
  %371 = vmatpush1.msra.mxu0 0.0
  %372 = vmatprep.subr.mxu0 0.0
  %373 = vmatpush1.msra.mxu0 0.0
  %374 = vmatprep.subr.mxu0 0.0
  %375 = vmatpush1.msra.mxu0 0.0
  %376 = vmatprep.subr.mxu0 0.0
  %377 = vmatpush1.msra.mxu0 0.0
  %378 = vmatprep.subr.mxu0 0.0
  %379 = vmatpush1.msra.mxu0 0.0
  %380 = vmatprep.subr.mxu0 0.0
  %381 = vmatpush1.msra.mxu0 0.0
  %382 = vmatprep.subr.mxu0 0.0
  %383 = vmatpush1.msra.mxu0 0.0
  %384 = vmatprep.subr.mxu0 0.0
  %385 = vmatpush1.msra.mxu0 0.0
  %386 = vmatprep.subr.mxu0 0.0
  %387 = vmatpush1.msra.mxu0 0.0
  %388 = vmatprep.subr.mxu0 0.0
  %389 = vmatpush1.msra.mxu0 0.0
  %390 = vmatprep.subr.mxu0 0.0
  %391 = vmatpush1.msra.mxu0 0.0
  %392 = vmatprep.subr.mxu0 0.0
  %393 = vmatpush1.msra.mxu0 0.0
  %394 = vmatprep.subr.mxu0 0.0
  %395 = vmatpush1.msra.mxu0 0.0
  %396 = vmatprep.subr.mxu0 0.0
  %397 = vmatpush1.msra.mxu0 0.0
  %398 = vmatprep.subr.mxu0 0.0
  %399 = vmatpush1.msra.mxu0 0.0
  %400 = vmatprep.subr.mxu0 0.0
  %401 = vmatpush1.msra.mxu0 0.0
  %402 = vmatprep.subr.mxu0 0.0
  %403 = vmatpush1.msra.mxu0 0.0
  %404 = vmatprep.subr.mxu0 0.0
  %405 = vmatpush1.msra.mxu0 0.0
  %406 = vmatprep.subr.mxu0 0.0
  %407 = vmatpush1.msra.mxu0 0.0
  %408 = vmatprep.subr.mxu0 0.0
  %409 = vmatpush1.msra.mxu0 0.0
  %410 = vmatprep.subr.mxu0 0.0
  %411 = vmatpush1.msra.mxu0 0.0
  %412 = vmatprep.subr.mxu0 0.0
  %413 = vmatpush1.msra.mxu0 0.0
  %414 = vmatprep.subr.mxu0 0.0
  %415 = vmatpush1.msra.mxu0 0.0
  %416 = vmatprep.subr.mxu0 0.0
  %417 = vmatpush1.msra.mxu0 0.0
  %418 = vmatprep.subr.mxu0 0.0
  %419 = vmatpush1.msra.mxu0 0.0
  %420 = vmatprep.subr.mxu0 0.0
  %421 = vmatpush1.msra.mxu0 0.0
  %422 = vmatprep.subr.mxu0 0.0
  %423 = vmatpush1.msra.mxu0 0.0
  %424 = vmatprep.subr.mxu0 0.0
  %425 = vmatpush1.msra.mxu0 0.0
  %426 = vmatprep.mubr.f32.mxu0 0.0
  %427 = vmatmul.mubr.f32.gmra.mrb[0].mxu0 %v289
  %v428 = vpop.f32.mrb[0].mxu0
  %v429 = vadd.f32 0.0, %v428
  %v430 = vpop.f32.mrb[0].mxu0
  %v431 = vadd.f32 0.0, %v430
  %432 = vdwg.mxu0
  %433 = vst [vmem:[%s5] sm:$0xff] %v99
  %434 = vst [vmem:[%s5 + $0x8] sm:$0xff] %v101
  %435 = vst [vmem:[%s5 + $0x10] sm:$0xff] %v176
  %436 = vst [vmem:[%s5 + $0x18] sm:$0xff] %v178
  %437 = vst [vmem:[%s5 + $0x20] sm:$0xff] %v358
  %438 = vst [vmem:[%s5 + $0x28] sm:$0xff] %v360
  %439 = vst [vmem:[%s5 + $0x30] sm:$0xff] %v429
  %440 = vst [vmem:[%s5 + $0x38] sm:$0xff] %v431
  // Predicated region
  $region18: #{tree_filter_v2_forward.3} parent=0 // pred_check
    _
  $region19: #{tree_filter_v2_forward.3} parent=0 // pred_check_branch
    %442 = sbr.rel (0) target = $region21
  $region20: #{tree_filter_v2_forward.3} parent=0 // pred_region
    _
  $region21: #{tree_filter_v2_forward.3} parent=0 // pred_fallthru
    _
  // Predicated region
  $region22: #{tree_filter_v2_forward.3} parent=0 // pred_check
    _
  $region23: #{tree_filter_v2_forward.3} parent=0 // pred_check_branch
    %444 = sbr.rel (0) target = $region25
  $region24: #{tree_filter_v2_forward.3} parent=0 // pred_region
    _
  $region25: #{tree_filter_v2_forward.3} parent=0 // pred_fallthru
    _
  // Predicated region
  $region26: #{tree_filter_v2_forward.3} parent=0 // pred_check
    _
  $region27: #{tree_filter_v2_forward.3} parent=0 // pred_check_branch
    %446 = sbr.rel (0) target = $region29
  $region28: #{tree_filter_v2_forward.3} parent=0 // pred_region
    _
  $region29: #{tree_filter_v2_forward.3} parent=0 // pred_fallthru
    _
  // Predicated region
  $region30: #{tree_filter_v2_forward.3} parent=0 // pred_check
    _
  $region31: #{tree_filter_v2_forward.3} parent=0 // pred_check_branch
    %448 = sbr.rel (0) target = $region33
  $region32: #{tree_filter_v2_forward.3} parent=0 // pred_region
    _
  $region33: #{tree_filter_v2_forward.3} parent=0 // pred_fallthru
    _

// kernel: tree_filter_v2_forward.4
$region0: #{tree_filter_v2_forward.4}
  #allocation0 [shape = 'u32[]', space=smem, size = 0x4, offset = 0x4, fixed_abs, tag = 'smem constant byte address 0x4 - core index']
  #allocation1 [shape = 'u32[144,128]{1,0:T(1,128)}', space=vmem, size = 0x12000, scoped, tag = 'internal scratch']
  %s0 = inlined_call_operand.vmem [shape: f32[16,512], index: 0, kind: input, shape index: {}]
  %s1 = inlined_call_operand.vmem [shape: f32[16,512], index: 1, kind: input, shape index: {}]
  %s2 = inlined_call_operand.vmem [shape: f32[1,512], index: 2, kind: output, shape index: {}]
  %s3 = sld [smem:[#allocation0]]
  $region18: #{tree_filter_v2_forward.4} parent=0
    _
  %s5 = ssub.s32 1, %s3
  %s6 = scalar_select 0, %s5, %s3
  // Predicated region
  $region2: #{tree_filter_v2_forward.4} parent=0 // pred_check
    _
  $region3: #{tree_filter_v2_forward.4} parent=0 // pred_check_branch
    %8 = sbr.rel (0) target = $region5
  $region4: #{tree_filter_v2_forward.4} parent=0 // pred_region
    _
  $region5: #{tree_filter_v2_forward.4} parent=0 // pred_fallthru
    _
  // Predicated region
  $region6: #{tree_filter_v2_forward.4} parent=0 // pred_check
    _
  $region7: #{tree_filter_v2_forward.4} parent=0 // pred_check_branch
    %10 = sbr.rel (0) target = $region9
  $region8: #{tree_filter_v2_forward.4} parent=0 // pred_region
    _
  $region9: #{tree_filter_v2_forward.4} parent=0 // pred_fallthru
    _
  %v11 = vld [vmem:[%s0] sm:$0xff]
  %v12 = vld [vmem:[%s0 + $0x8] sm:$0xff]
  %v13 = vld [vmem:[%s0 + $0x10] sm:$0xff]
  %v14 = vld [vmem:[%s0 + $0x18] sm:$0xff]
  %v15 = vld [vmem:[%s0 + $0x20] sm:$0xff]
  %v16 = vld [vmem:[%s0 + $0x28] sm:$0xff]
  %v17 = vld [vmem:[%s0 + $0x30] sm:$0xff]
  %v18 = vld [vmem:[%s0 + $0x38] sm:$0xff]
  %v19 = vld [vmem:[%s1] sm:$0xff]
  %v20 = vld [vmem:[%s1 + $0x8] sm:$0xff]
  %v21 = vld [vmem:[%s1 + $0x10] sm:$0xff]
  %v22 = vld [vmem:[%s1 + $0x18] sm:$0xff]
  %v23 = vld [vmem:[%s1 + $0x20] sm:$0xff]
  %v24 = vld [vmem:[%s1 + $0x28] sm:$0xff]
  %v25 = vld [vmem:[%s1 + $0x30] sm:$0xff]
  %v26 = vld [vmem:[%s1 + $0x38] sm:$0xff]
  %v27 = vsub.f32 %v11, %v19
  %v28 = vsub.f32 %v12, %v20
  %v29 = vsub.f32 %v13, %v21
  %v30 = vsub.f32 %v14, %v22
  %v31 = vsub.f32 %v15, %v23
  %v32 = vsub.f32 %v16, %v24
  %v33 = vsub.f32 %v17, %v25
  %v34 = vsub.f32 %v18, %v26
  %v35 = vmul.f32 %v27, %v27
  %v36 = vmul.f32 %v28, %v28
  %v37 = vmul.f32 %v29, %v29
  %v38 = vmul.f32 %v30, %v30
  %v39 = vmul.f32 %v31, %v31
  %v40 = vmul.f32 %v32, %v32
  %v41 = vmul.f32 %v33, %v33
  %v42 = vmul.f32 %v34, %v34
  %v43 = vadd.f32 %v35, %v39
  %v44 = vrot.slane %v43, 4
  %v45 = vadd.f32 %v43, %v44
  %v46 = vrot.slane %v45, 2
  %v47 = vadd.f32 %v45, %v46
  %v48 = vrot.slane %v47, 1
  %v49 = vadd.f32 %v47, %v48
  %v50 = vadd.f32 %v36, %v40
  %v51 = vrot.slane %v50, 4
  %v52 = vadd.f32 %v50, %v51
  %v53 = vrot.slane %v52, 2
  %v54 = vadd.f32 %v52, %v53
  %v55 = vrot.slane %v54, 1
  %v56 = vadd.f32 %v54, %v55
  %v57 = vadd.f32 %v37, %v41
  %v58 = vrot.slane %v57, 4
  %v59 = vadd.f32 %v57, %v58
  %v60 = vrot.slane %v59, 2
  %v61 = vadd.f32 %v59, %v60
  %v62 = vrot.slane %v61, 1
  %v63 = vadd.f32 %v61, %v62
  %v64 = vadd.f32 %v38, %v42
  %v65 = vrot.slane %v64, 4
  %v66 = vadd.f32 %v64, %v65
  %v67 = vrot.slane %v66, 2
  %v68 = vadd.f32 %v66, %v67
  %v69 = vrot.slane %v68, 1
  %v70 = vadd.f32 %v68, %v69
  %v71 = vsub.f32 0.0, %v49
  %v72 = vsub.f32 0.0, %v56
  %v73 = vsub.f32 0.0, %v63
  %v74 = vsub.f32 0.0, %v70
  %v75 = vmul.f32 %v71, 1.442695
  %v76 = vpow.pop %v75
  %v77 = vmul.f32 %v72, 1.442695
  %v78 = vpow.pop %v77
  %v79 = vmul.f32 %v73, 1.442695
  %v80 = vpow.pop %v79
  %v81 = vmul.f32 %v74, 1.442695
  %v82 = vpow.pop %v81
  %v83 = vmul.f32 %v76, 0.99004984
  %v84 = vmul.f32 %v78, 0.99004984
  %v85 = vmul.f32 %v80, 0.99004984
  %v86 = vmul.f32 %v82, 0.99004984
  %v91 = vcombine.low %v83, %v84
  %v92 = vcombine.low %v85, %v86
  %v94 = vunpack.c.l.s4 1966171168
  %v95 = vunpack.c.0.s8 %v94
  %v96 = vlaneseq
  %v97 = vshrl.u32 %v96, 7
  %v98 = vsub.s32 %v95, %v97
  %v99 = vrot.slane %v91, %v98
  %v101 = vunpack.c.l.s4 1966171168
  %v102 = vunpack.c.0.s8 %v101
  %v103 = vlaneseq
  %v104 = vshrl.u32 %v103, 7
  %v105 = vsub.s32 %v102, %v104
  %v106 = vrot.slane %v92, %v105
  %v107 = vcombine.low %v99, %v106
  %v109 = vunpack.c.l.s4 1966171168
  %v110 = vunpack.c.0.s8 %v109
  %v111 = vlaneseq
  %v112 = vshrl.u32 %v111, 7
  %v113 = vsub.s32 %v110, %v112
  %v114 = vrot.slane %v107, %v113
  %v116 = vlaneseq
  %vm117 = vcmp.ge.s32.totalorder %v116, 0
  %vm118 = vcmp.lt.s32.totalorder %v116, 512
  %vm119 = vmand %vm117, %vm118
  %120 = vst.msk [vmem:[%s2] sm:$0xf] %vm119, %v114
  // Predicated region
  $region10: #{tree_filter_v2_forward.4} parent=0 // pred_check
    _
  $region11: #{tree_filter_v2_forward.4} parent=0 // pred_check_branch
    %122 = sbr.rel (0) target = $region13
  $region12: #{tree_filter_v2_forward.4} parent=0 // pred_region
    _
  $region13: #{tree_filter_v2_forward.4} parent=0 // pred_fallthru
    _
  // Predicated region
  $region14: #{tree_filter_v2_forward.4} parent=0 // pred_check
    _
  $region15: #{tree_filter_v2_forward.4} parent=0 // pred_check_branch
    %124 = sbr.rel (0) target = $region17
  $region16: #{tree_filter_v2_forward.4} parent=0 // pred_region
    _
  $region17: #{tree_filter_v2_forward.4} parent=0 // pred_fallthru
    _

// kernel: tree_filter_v2_forward.5
$region0: #{tree_filter_v2_forward.5}
  #allocation0 [shape = 'u32[]', space=smem, size = 0x4, offset = 0x4, fixed_abs, tag = 'smem constant byte address 0x4 - core index']
  #allocation1 [shape = 'u32[144,128]{1,0:T(1,128)}', space=vmem, size = 0x12000, scoped, tag = 'internal scratch']
  #allocation2 [shape = 'f32[256,9]{1,0:T(8,128)}', space=vmem, size = 0x20000, scoped, tag = 'scratch operand']
  #allocation3 [shape = 's32[1]{0}', space=sflag, size = 0x4, scoped, tag = 'scoped memory for tree_filter_v2_forward.5']
  #allocation4 [shape = 'u8[2048]{0}', space=smem, size = 0x800, scoped, tag = 'prefetched SMEM operand 0']
  #allocation5 [shape = 'u8[2048]{0}', space=smem, size = 0x800, scoped, tag = 'prefetched SMEM operand 1']
  %s0 = inlined_call_operand.vmem [shape: s32[512], index: 0, kind: input, shape index: {}]
  %s1 = inlined_call_operand.vmem [shape: s32[512], index: 1, kind: input, shape index: {}]
  %s2 = inlined_call_operand.vmem [shape: f32[512], index: 2, kind: input, shape index: {}]
  %s3 = inlined_call_operand.vmem [shape: f32[2,256,9], index: 3, kind: input, shape index: {}]
  %s4 = inlined_call_operand.vmem [shape: f32[2,256,8], index: 4, kind: input, shape index: {}]
  %s5 = inlined_call_operand.vmem [shape: f32[2,256,8], index: 5, kind: output, shape index: {}]
  %s6 = sld [smem:[#allocation0]]
  $region63: #{tree_filter_v2_forward.5} parent=0
    _
  %s8 = ssub.s32 1, %s6
  %s9 = scalar_select 0, %s8, %s6
  %s10 = sshll.u32 %s0, 4
  %s11 = int_to_ptr.vmem [resolvable:$true] %s10
  %13 = dma.vmem_to_smem %s11, 64, [#allocation4], [#allocation3]
  %s14 = sshll.u32 %s1, 4
  %s15 = int_to_ptr.vmem [resolvable:$true] %s14
  %17 = dma.vmem_to_smem %s15, 64, [#allocation5], [#allocation3]
  %18 = dma.done [#allocation3], 128
  %19 = sfence
  $region1: #{tree_filter_v2_forward.5} parent=0
    #allocation6 [shape = 'u8[2048]{0}', space=smem, size = 0x800, scoped, tag = 'input window, operand 2, single buffered']
    #allocation7 [shape = 's32[2]{0}', space=sflag, size = 0x8, scoped, tag = 'scoped memory for tree_filter_v2_forward.5']
    %20 = vsyncpa [#allocation7], 0
    loop: start=0, step=1, limit=4
    $region2: #{tree_filter_v2_forward.5} parent=1 // loop_pre_header
      _
    $region3: #{tree_filter_v2_forward.5} parent=1 // loop_header
      %s22 = sphi 0, %s26
      %p23 = scmp.ge.s32.totalorder %s22, 4
      %s30 = sphi 0, %s30
      %s32 = sphi 0, %s30
      %s33 = sphi 0, %s32
      %s47 = sphi 0, %s33
      %s53 = sphi 0, %s55
      %s56 = sphi 0, %s53
      %s57 = sphi 0, %s56
      %s73 = sphi 0, %s57
      %s79 = sphi 0, %s81
      %s82 = sphi 0, %s79
      %s83 = sphi 0, %s82
      %s99 = sphi 0, %s83
      %s105 = sphi 0, %s107
      %s108 = sphi 0, %s105
      %s109 = sphi 0, %s108
      %s125 = sphi 0, %s109
    $region4: #{tree_filter_v2_forward.5} parent=1 // loop_header_branch
      %25 = sbr.rel (%p23) target = $region8
    $region5: #{tree_filter_v2_forward.5} parent=1 // loop_body
      %s27 = ssub.s32 %s22, 1
      %s28 = ssub.s32 %s22, 2
      %s29 = sadd.s32 %s22, 1
      %s31 = sadd.s32 %s30, 1
      %p34 = scmp.eq.s32.totalorder %s22, 1
      %p35 = scmp.ne.s32.totalorder %s30, %s32
      %p36 = scmp.eq.s32.totalorder %s22, 0
      %p37 = por %p35, %p36
      %p38 = scmp.ne.s32.totalorder %s30, %s32
      %p39 = scmp.eq.s32.totalorder %s27, 1
      %p40 = por %p38, %p39
      %p41 = scmp.ne.s32.totalorder %s32, %s33
      %p42 = scmp.eq.s32.totalorder %s27, 0
      %p43 = por %p41, %p42
      %p44 = scmp.ne.s32.totalorder %s32, %s33
      %p45 = scmp.eq.s32.totalorder %s28, 1
      %p46 = por %p44, %p45
      %p48 = scmp.ne.s32.totalorder %s33, %s47
      %p49 = scmp.eq.s32.totalorder %s28, 0
      %p50 = por %p48, %p49
      %s51 = ssub.s32 %s22, %s29
      %p52 = scmp.eq.s32.totalorder %s51, 0
      %s54 = sadd.s32 %s53, 1
      %s55 = scalar_select %p52, %s53, %s54
      %p58 = pneg %p52
      %p59 = scmp.eq.s32.totalorder %s22, 1
      %p60 = por %p58, %p59
      %p61 = scmp.ne.s32.totalorder %s53, %s56
      %p62 = scmp.eq.s32.totalorder %s22, 0
      %p63 = por %p61, %p62
      %p64 = scmp.ne.s32.totalorder %s53, %s56
      %p65 = scmp.eq.s32.totalorder %s27, 1
      %p66 = por %p64, %p65
      %p67 = scmp.ne.s32.totalorder %s56, %s57
      %p68 = scmp.eq.s32.totalorder %s27, 0
      %p69 = por %p67, %p68
      %p70 = scmp.ne.s32.totalorder %s56, %s57
      %p71 = scmp.eq.s32.totalorder %s28, 1
      %p72 = por %p70, %p71
      %p74 = scmp.ne.s32.totalorder %s57, %s73
      %p75 = scmp.eq.s32.totalorder %s28, 0
      %p76 = por %p74, %p75
      %s77 = ssub.s32 %s22, %s29
      %p78 = scmp.eq.s32.totalorder %s77, 0
      %s80 = sadd.s32 %s79, 1
      %s81 = scalar_select %p78, %s79, %s80
      %p84 = pneg %p78
      %p85 = scmp.eq.s32.totalorder %s22, 1
      %p86 = por %p84, %p85
      %p87 = scmp.ne.s32.totalorder %s79, %s82
      %p88 = scmp.eq.s32.totalorder %s22, 0
      %p89 = por %p87, %p88
      %p90 = scmp.ne.s32.totalorder %s79, %s82
      %p91 = scmp.eq.s32.totalorder %s27, 1
      %p92 = por %p90, %p91
      %p93 = scmp.ne.s32.totalorder %s82, %s83
      %p94 = scmp.eq.s32.totalorder %s27, 0
      %p95 = por %p93, %p94
      %p96 = scmp.ne.s32.totalorder %s82, %s83
      %p97 = scmp.eq.s32.totalorder %s28, 1
      %p98 = por %p96, %p97
      %p100 = scmp.ne.s32.totalorder %s83, %s99
      %p101 = scmp.eq.s32.totalorder %s28, 0
      %p102 = por %p100, %p101
      %s103 = ssub.s32 %s22, %s29
      %p104 = scmp.eq.s32.totalorder %s103, 0
      %s106 = sadd.s32 %s105, 1
      %s107 = scalar_select %p104, %s105, %s106
      %p110 = pneg %p104
      %p111 = scmp.eq.s32.totalorder %s22, 1
      %p112 = por %p110, %p111
      %p113 = scmp.ne.s32.totalorder %s105, %s108
      %p114 = scmp.eq.s32.totalorder %s22, 0
      %p115 = por %p113, %p114
      %p116 = scmp.ne.s32.totalorder %s105, %s108
      %p117 = scmp.eq.s32.totalorder %s27, 1
      %p118 = por %p116, %p117
      %p119 = scmp.ne.s32.totalorder %s108, %s109
      %p120 = scmp.eq.s32.totalorder %s27, 0
      %p121 = por %p119, %p120
      %p122 = scmp.ne.s32.totalorder %s108, %s109
      %p123 = scmp.eq.s32.totalorder %s28, 1
      %p124 = por %p122, %p123
      %p126 = scmp.ne.s32.totalorder %s109, %s125
      %p127 = scmp.eq.s32.totalorder %s28, 0
      %p128 = por %p126, %p127
      %p129 = scmp.le.s32.totalorder 1, %s22
      %p130 = scmp.lt.s32.totalorder %s22, 3
      %p131 = pnand %p129, %p130
      %p132 = pneg %p131
      // Predicated region
      $region9: #{tree_filter_v2_forward.5} parent=5 // pred_check
        _
      $region10: #{tree_filter_v2_forward.5} parent=5 // pred_check_branch
        %134 = sbr.rel (%p131) target = $region12
      $region11: #{tree_filter_v2_forward.5} parent=5 // pred_region
        %s135 = ssub.s32 %s22, 1
        // Predicated region
        $region13: #{tree_filter_v2_forward.5} parent=11 // pred_check
          %p136 = pneg %p43
        $region14: #{tree_filter_v2_forward.5} parent=11 // pred_check_branch
          %138 = sbr.rel (%p136) target = $region16
        $region15: #{tree_filter_v2_forward.5} parent=11 // pred_region
          %s140 = ssub.s32 64, 64
          %141 = vsyncadd [#allocation7], %s140
          %s143 = sshll.u32 %s2, 4
          %s144 = int_to_ptr.vmem [resolvable:$true] %s143
          %146 = dma.vmem_to_smem %s144, 64, [#allocation6], [#allocation7]
        $region16: #{tree_filter_v2_forward.5} parent=11 // pred_fallthru
          _
      $region12: #{tree_filter_v2_forward.5} parent=5 // pred_fallthru
        _
      %p147 = scmp.lt.s32.totalorder %s22, 2
      // Predicated region
      $region17: #{tree_filter_v2_forward.5} parent=5 // pred_check
        %p148 = pneg %p147
      $region18: #{tree_filter_v2_forward.5} parent=5 // pred_check_branch
        %150 = sbr.rel (%p148) target = $region20
      $region19: #{tree_filter_v2_forward.5} parent=5 // pred_region
        // Predicated region
        $region21: #{tree_filter_v2_forward.5} parent=19 // pred_check
          %p151 = pneg %p63
        $region22: #{tree_filter_v2_forward.5} parent=19 // pred_check_branch
          %153 = sbr.rel (%p151) target = $region24
        $region23: #{tree_filter_v2_forward.5} parent=19 // pred_region
          %p154 = scmp.lt.s32.totalorder %s22, 1
          %s155 = scalar_select %p154, %s22, 1
          %s156 = smul.addr %s155, 32
          %s157 = smul.addr %s156, 8
          %s158 = scalar_lea.vmem %s3, %s157
        $region24: #{tree_filter_v2_forward.5} parent=19 // pred_fallthru
          _
        // Predicated region
        $region25: #{tree_filter_v2_forward.5} parent=19 // pred_check
          %p159 = pneg %p89
        $region26: #{tree_filter_v2_forward.5} parent=19 // pred_check_branch
          %161 = sbr.rel (%p159) target = $region28
        $region27: #{tree_filter_v2_forward.5} parent=19 // pred_region
          %p162 = scmp.lt.s32.totalorder %s22, 1
          %s163 = scalar_select %p162, %s22, 1
          %s164 = smul.addr %s163, 32
          %s165 = smul.addr %s164, 8
          %s166 = scalar_lea.vmem %s4, %s165
        $region28: #{tree_filter_v2_forward.5} parent=19 // pred_fallthru
          _
      $region20: #{tree_filter_v2_forward.5} parent=5 // pred_fallthru
        _
      %p167 = scmp.le.s32.totalorder 1, %s22
      %p168 = scmp.lt.s32.totalorder %s22, 3
      %p169 = pnand %p167, %p168
      %p170 = pneg %p169
      // Predicated region
      $region29: #{tree_filter_v2_forward.5} parent=5 // pred_check
        _
      $region30: #{tree_filter_v2_forward.5} parent=5 // pred_check_branch
        %172 = sbr.rel (%p169) target = $region32
      $region31: #{tree_filter_v2_forward.5} parent=5 // pred_region
        %s173 = ssub.s32 %s22, 1
        // Predicated region
        $region33: #{tree_filter_v2_forward.5} parent=31 // pred_check
          %p174 = pneg %p43
        $region34: #{tree_filter_v2_forward.5} parent=31 // pred_check_branch
          %176 = sbr.rel (%p174) target = $region36
        $region35: #{tree_filter_v2_forward.5} parent=31 // pred_region
          %177 = dma.done [#allocation7], 64
        $region36: #{tree_filter_v2_forward.5} parent=31 // pred_fallthru
          _
        %178 = sfence
        %p179 = pneg %p43
        %p180 = pneg %p40
        %p181 = scmp.lt.s32.totalorder %s27, 1
        %s182 = scalar_select %p181, %s27, 1
        %s183 = smul.addr %s182, 32
        %s184 = smul.addr %s183, 8
        %s185 = scalar_lea.vmem %s3, %s184
        %p186 = pneg %p69
        %p187 = pneg %p66
        %p188 = scmp.lt.s32.totalorder %s27, 1
        %s189 = scalar_select %p188, %s27, 1
        %s190 = smul.addr %s189, 32
        %s191 = smul.addr %s190, 8
        %s192 = scalar_lea.vmem %s4, %s191
        %p193 = pneg %p95
        %p194 = pneg %p92
        %p195 = pneg %p121
        %p196 = pneg %p118
        %p197 = scmp.lt.s32.totalorder %s27, 1
        %s198 = scalar_select %p197, %s27, 1
        %s199 = smul.addr %s198, 32
        %s200 = smul.addr %s199, 8
        %s201 = scalar_lea.vmem %s5, %s200
        %p202 = scmp.lt.s32.totalorder %s27, 1
        %s203 = scalar_select %p202, %s27, 1
        %s204 = smul.addr %s203, 32
        %s205 = smul.addr %s204, 8
        %s206 = scalar_lea.vmem %s3, %s205
        %p207 = scmp.lt.s32.totalorder %s27, 1
        %s208 = scalar_select %p207, %s27, 1
        %s209 = smul.addr %s208, 32
        %s210 = smul.addr %s209, 8
        %s211 = scalar_lea.vmem %s4, %s210
        %p212 = scmp.lt.s32.totalorder %s27, 1
        %s213 = scalar_select %p212, %s27, 1
        %s214 = smul.addr %s213, 32
        %s215 = smul.addr %s214, 8
        %s216 = scalar_lea.vmem %s5, %s215
        %s217 = smul.u32 %s27, 256
        %v218 = vld [vmem:[%s206] sm:$0xff]
        %v219 = vld [vmem:[%s206 + $0x8] sm:$0xff]
        %v220 = vld [vmem:[%s206 + $0x10] sm:$0xff]
        %v221 = vld [vmem:[%s206 + $0x18] sm:$0xff]
        %v222 = vld [vmem:[%s206 + $0x20] sm:$0xff]
        %v223 = vld [vmem:[%s206 + $0x28] sm:$0xff]
        %v224 = vld [vmem:[%s206 + $0x30] sm:$0xff]
        %v225 = vld [vmem:[%s206 + $0x38] sm:$0xff]
        %v226 = vld [vmem:[%s206 + $0x40] sm:$0xff]
        %v227 = vld [vmem:[%s206 + $0x48] sm:$0xff]
        %v228 = vld [vmem:[%s206 + $0x50] sm:$0xff]
        %v229 = vld [vmem:[%s206 + $0x58] sm:$0xff]
        %v230 = vld [vmem:[%s206 + $0x60] sm:$0xff]
        %v231 = vld [vmem:[%s206 + $0x68] sm:$0xff]
        %v232 = vld [vmem:[%s206 + $0x70] sm:$0xff]
        %v233 = vld [vmem:[%s206 + $0x78] sm:$0xff]
        %v234 = vld [vmem:[%s206 + $0x80] sm:$0xff]
        %v235 = vld [vmem:[%s206 + $0x88] sm:$0xff]
        %v236 = vld [vmem:[%s206 + $0x90] sm:$0xff]
        %v237 = vld [vmem:[%s206 + $0x98] sm:$0xff]
        %v238 = vld [vmem:[%s206 + $0xa0] sm:$0xff]
        %v239 = vld [vmem:[%s206 + $0xa8] sm:$0xff]
        %v240 = vld [vmem:[%s206 + $0xb0] sm:$0xff]
        %v241 = vld [vmem:[%s206 + $0xb8] sm:$0xff]
        %v242 = vld [vmem:[%s206 + $0xc0] sm:$0xff]
        %v243 = vld [vmem:[%s206 + $0xc8] sm:$0xff]
        %v244 = vld [vmem:[%s206 + $0xd0] sm:$0xff]
        %v245 = vld [vmem:[%s206 + $0xd8] sm:$0xff]
        %v246 = vld [vmem:[%s206 + $0xe0] sm:$0xff]
        %v247 = vld [vmem:[%s206 + $0xe8] sm:$0xff]
        %v248 = vld [vmem:[%s206 + $0xf0] sm:$0xff]
        %v249 = vld [vmem:[%s206 + $0xf8] sm:$0xff]
        %vm250 = vcmask 72704
        %251 = vst.msk [vmem:[#allocation2] sm:$0xff] %vm250, %v218
        %252 = vst.msk [vmem:[#allocation2 + $0x8] sm:$0xff] %vm250, %v219
        %253 = vst.msk [vmem:[#allocation2 + $0x10] sm:$0xff] %vm250, %v220
        %254 = vst.msk [vmem:[#allocation2 + $0x18] sm:$0xff] %vm250, %v221
        %255 = vst.msk [vmem:[#allocation2 + $0x20] sm:$0xff] %vm250, %v222
        %256 = vst.msk [vmem:[#allocation2 + $0x28] sm:$0xff] %vm250, %v223
        %257 = vst.msk [vmem:[#allocation2 + $0x30] sm:$0xff] %vm250, %v224
        %258 = vst.msk [vmem:[#allocation2 + $0x38] sm:$0xff] %vm250, %v225
        %259 = vst.msk [vmem:[#allocation2 + $0x40] sm:$0xff] %vm250, %v226
        %260 = vst.msk [vmem:[#allocation2 + $0x48] sm:$0xff] %vm250, %v227
        %261 = vst.msk [vmem:[#allocation2 + $0x50] sm:$0xff] %vm250, %v228
        %262 = vst.msk [vmem:[#allocation2 + $0x58] sm:$0xff] %vm250, %v229
        %263 = vst.msk [vmem:[#allocation2 + $0x60] sm:$0xff] %vm250, %v230
        %264 = vst.msk [vmem:[#allocation2 + $0x68] sm:$0xff] %vm250, %v231
        %265 = vst.msk [vmem:[#allocation2 + $0x70] sm:$0xff] %vm250, %v232
        %266 = vst.msk [vmem:[#allocation2 + $0x78] sm:$0xff] %vm250, %v233
        %267 = vst.msk [vmem:[#allocation2 + $0x80] sm:$0xff] %vm250, %v234
        %268 = vst.msk [vmem:[#allocation2 + $0x88] sm:$0xff] %vm250, %v235
        %269 = vst.msk [vmem:[#allocation2 + $0x90] sm:$0xff] %vm250, %v236
        %270 = vst.msk [vmem:[#allocation2 + $0x98] sm:$0xff] %vm250, %v237
        %271 = vst.msk [vmem:[#allocation2 + $0xa0] sm:$0xff] %vm250, %v238
        %272 = vst.msk [vmem:[#allocation2 + $0xa8] sm:$0xff] %vm250, %v239
        %273 = vst.msk [vmem:[#allocation2 + $0xb0] sm:$0xff] %vm250, %v240
        %274 = vst.msk [vmem:[#allocation2 + $0xb8] sm:$0xff] %vm250, %v241
        %275 = vst.msk [vmem:[#allocation2 + $0xc0] sm:$0xff] %vm250, %v242
        %276 = vst.msk [vmem:[#allocation2 + $0xc8] sm:$0xff] %vm250, %v243
        %277 = vst.msk [vmem:[#allocation2 + $0xd0] sm:$0xff] %vm250, %v244
        %278 = vst.msk [vmem:[#allocation2 + $0xd8] sm:$0xff] %vm250, %v245
        %279 = vst.msk [vmem:[#allocation2 + $0xe0] sm:$0xff] %vm250, %v246
        %280 = vst.msk [vmem:[#allocation2 + $0xe8] sm:$0xff] %vm250, %v247
        %281 = vst.msk [vmem:[#allocation2 + $0xf0] sm:$0xff] %vm250, %v248
        %282 = vst.msk [vmem:[#allocation2 + $0xf8] sm:$0xff] %vm250, %v249
        loop: start=1, step=1, limit=256
        $region37: #{tree_filter_v2_forward.5} parent=31 // loop_pre_header
          _
        $region38: #{tree_filter_v2_forward.5} parent=31 // loop_header
          %s284 = sphi 1, %s288
          %p285 = scmp.ge.s32.totalorder %s284, 256
        $region39: #{tree_filter_v2_forward.5} parent=31 // loop_header_branch
          %287 = sbr.rel (%p285) target = $region43
        $region40: #{tree_filter_v2_forward.5} parent=31 // loop_body
          %s289 = ssub.s32 256, %s284
          %s290 = sadd.s32 %s217, %s289
          %s291 = sld [smem:[#allocation4 + %s290]]
          %s292 = sld [smem:[#allocation5 + %s290]]
          %s293 = sld [smem:[#allocation6 + %s290]]
          %s294 = scalar_lea.vmem [#allocation2], %s292
          %v295 = vld [vmem:[%s294] sm:$0x1]
          %s296 = scalar_lea.vmem [#allocation2], %s291
          %v297 = vld [vmem:[%s296] sm:$0x1]
          %v298 = vstv %s293
          %v299 = vmul.f32 %v298, %v297
          %v300 = vadd.f32 %v295, %v299
          %vm301 = vcmask 65536
          %302 = vst.msk [vmem:[%s294] sm:$0x1] %vm301, %v300
        $region41: #{tree_filter_v2_forward.5} parent=31 // loop_footer
          %s288 = sadd.s32 1, %s284
        $region42: #{tree_filter_v2_forward.5} parent=31 // loop_footer_branch
          %283 = sbr.rel target = $region38
        $region43: #{tree_filter_v2_forward.5} parent=31 // loop_exit
          _
        loop: start=1, step=1, limit=256
        $region44: #{tree_filter_v2_forward.5} parent=31 // loop_pre_header
          _
        $region45: #{tree_filter_v2_forward.5} parent=31 // loop_header
          %s304 = sphi 1, %s308
          %p305 = scmp.ge.s32.totalorder %s304, 256
        $region46: #{tree_filter_v2_forward.5} parent=31 // loop_header_branch
          %307 = sbr.rel (%p305) target = $region50
        $region47: #{tree_filter_v2_forward.5} parent=31 // loop_body
          %s309 = sadd.s32 %s217, %s304
          %s310 = sld [smem:[#allocation4 + %s309]]
          %s311 = sld [smem:[#allocation5 + %s309]]
          %s312 = sld [smem:[#allocation6 + %s309]]
          %s313 = scalar_lea.vmem [#allocation2], %s310
          %v314 = vld [vmem:[%s313] sm:$0x1]
          %s315 = scalar_lea.vmem [#allocation2], %s311
          %v316 = vld [vmem:[%s315] sm:$0x1]
          %v317 = vstv %s312
          %v318 = vmul.f32 %v317, %v314
          %v319 = vsub.f32 %v316, %v318
          %v320 = vmul.f32 %v317, %v319
          %v321 = vadd.f32 %v314, %v320
          %vm322 = vcmask 65536
          %323 = vst.msk [vmem:[%s313] sm:$0x1] %vm322, %v321
        $region48: #{tree_filter_v2_forward.5} parent=31 // loop_footer
          %s308 = sadd.s32 1, %s304
        $region49: #{tree_filter_v2_forward.5} parent=31 // loop_footer_branch
          %303 = sbr.rel target = $region45
        $region50: #{tree_filter_v2_forward.5} parent=31 // loop_exit
          _
        %v324 = vld [vmem:[#allocation2] sm:$0xff]
        %v325 = vld [vmem:[#allocation2 + $0x8] sm:$0xff]
        %v326 = vld [vmem:[#allocation2 + $0x10] sm:$0xff]
        %v327 = vld [vmem:[#allocation2 + $0x18] sm:$0xff]
        %v328 = vld [vmem:[#allocation2 + $0x20] sm:$0xff]
        %v329 = vld [vmem:[#allocation2 + $0x28] sm:$0xff]
        %v330 = vld [vmem:[#allocation2 + $0x30] sm:$0xff]
        %v331 = vld [vmem:[#allocation2 + $0x38] sm:$0xff]
        %v332 = vld [vmem:[#allocation2 + $0x40] sm:$0xff]
        %v333 = vld [vmem:[#allocation2 + $0x48] sm:$0xff]
        %v334 = vld [vmem:[#allocation2 + $0x50] sm:$0xff]
        %v335 = vld [vmem:[#allocation2 + $0x58] sm:$0xff]
        %v336 = vld [vmem:[#allocation2 + $0x60] sm:$0xff]
        %v337 = vld [vmem:[#allocation2 + $0x68] sm:$0xff]
        %v338 = vld [vmem:[#allocation2 + $0x70] sm:$0xff]
        %v339 = vld [vmem:[#allocation2 + $0x78] sm:$0xff]
        %v340 = vld [vmem:[#allocation2 + $0x80] sm:$0xff]
        %v341 = vld [vmem:[#allocation2 + $0x88] sm:$0xff]
        %v342 = vld [vmem:[#allocation2 + $0x90] sm:$0xff]
        %v343 = vld [vmem:[#allocation2 + $0x98] sm:$0xff]
        %v344 = vld [vmem:[#allocation2 + $0xa0] sm:$0xff]
        %v345 = vld [vmem:[#allocation2 + $0xa8] sm:$0xff]
        %v346 = vld [vmem:[#allocation2 + $0xb0] sm:$0xff]
        %v347 = vld [vmem:[#allocation2 + $0xb8] sm:$0xff]
        %v348 = vld [vmem:[#allocation2 + $0xc0] sm:$0xff]
        %v349 = vld [vmem:[#allocation2 + $0xc8] sm:$0xff]
        %v350 = vld [vmem:[#allocation2 + $0xd0] sm:$0xff]
        %v351 = vld [vmem:[#allocation2 + $0xd8] sm:$0xff]
        %v352 = vld [vmem:[#allocation2 + $0xe0] sm:$0xff]
        %v353 = vld [vmem:[#allocation2 + $0xe8] sm:$0xff]
        %v354 = vld [vmem:[#allocation2 + $0xf0] sm:$0xff]
        %v355 = vld [vmem:[#allocation2 + $0xf8] sm:$0xff]
        %v356 = vmul.f32 %v324, 0.5
        %v357 = vmul.f32 %v325, 0.5
        %v358 = vmul.f32 %v326, 0.5
        %v359 = vmul.f32 %v327, 0.5
        %v360 = vmul.f32 %v328, 0.5
        %v361 = vmul.f32 %v329, 0.5
        %v362 = vmul.f32 %v330, 0.5
        %v363 = vmul.f32 %v331, 0.5
        %v364 = vmul.f32 %v332, 0.5
        %v365 = vmul.f32 %v333, 0.5
        %v366 = vmul.f32 %v334, 0.5
        %v367 = vmul.f32 %v335, 0.5
        %v368 = vmul.f32 %v336, 0.5
        %v369 = vmul.f32 %v337, 0.5
        %v370 = vmul.f32 %v338, 0.5
        %v371 = vmul.f32 %v339, 0.5
        %v372 = vmul.f32 %v340, 0.5
        %v373 = vmul.f32 %v341, 0.5
        %v374 = vmul.f32 %v342, 0.5
        %v375 = vmul.f32 %v343, 0.5
        %v376 = vmul.f32 %v344, 0.5
        %v377 = vmul.f32 %v345, 0.5
        %v378 = vmul.f32 %v346, 0.5
        %v379 = vmul.f32 %v347, 0.5
        %v380 = vmul.f32 %v348, 0.5
        %v381 = vmul.f32 %v349, 0.5
        %v382 = vmul.f32 %v350, 0.5
        %v383 = vmul.f32 %v351, 0.5
        %v384 = vmul.f32 %v352, 0.5
        %v385 = vmul.f32 %v353, 0.5
        %v386 = vmul.f32 %v354, 0.5
        %v387 = vmul.f32 %v355, 0.5
        %v388 = vadd.f32 %v324, 1e-08
        %v389 = vadd.f32 %v325, 1e-08
        %v390 = vadd.f32 %v326, 1e-08
        %v391 = vadd.f32 %v327, 1e-08
        %v392 = vadd.f32 %v328, 1e-08
        %v393 = vadd.f32 %v329, 1e-08
        %v394 = vadd.f32 %v330, 1e-08
        %v395 = vadd.f32 %v331, 1e-08
        %v396 = vadd.f32 %v332, 1e-08
        %v397 = vadd.f32 %v333, 1e-08
        %v398 = vadd.f32 %v334, 1e-08
        %v399 = vadd.f32 %v335, 1e-08
        %v400 = vadd.f32 %v336, 1e-08
        %v401 = vadd.f32 %v337, 1e-08
        %v402 = vadd.f32 %v338, 1e-08
        %v403 = vadd.f32 %v339, 1e-08
        %v404 = vadd.f32 %v340, 1e-08
        %v405 = vadd.f32 %v341, 1e-08
        %v406 = vadd.f32 %v342, 1e-08
        %v407 = vadd.f32 %v343, 1e-08
        %v408 = vadd.f32 %v344, 1e-08
        %v409 = vadd.f32 %v345, 1e-08
        %v410 = vadd.f32 %v346, 1e-08
        %v411 = vadd.f32 %v347, 1e-08
        %v412 = vadd.f32 %v348, 1e-08
        %v413 = vadd.f32 %v349, 1e-08
        %v414 = vadd.f32 %v350, 1e-08
        %v415 = vadd.f32 %v351, 1e-08
        %v416 = vadd.f32 %v352, 1e-08
        %v417 = vadd.f32 %v353, 1e-08
        %v418 = vadd.f32 %v354, 1e-08
        %v419 = vadd.f32 %v355, 1e-08
        %421 = vset.pattern.permute.xlu0 8
        %422 = vperm.xlu0 %421, %v388
        %v423 = vpop.permute.xlu0 %422
        %426 = vset.pattern.permute.xlu0 8
        %427 = vperm.xlu0 %426, %v389
        %v428 = vpop.permute.xlu0 %427
        %431 = vset.pattern.permute.xlu0 8
        %432 = vperm.xlu0 %431, %v390
        %v433 = vpop.permute.xlu0 %432
        %436 = vset.pattern.permute.xlu0 8
        %437 = vperm.xlu0 %436, %v391
        %v438 = vpop.permute.xlu0 %437
        %441 = vset.pattern.permute.xlu0 8
        %442 = vperm.xlu0 %441, %v392
        %v443 = vpop.permute.xlu0 %442
        %446 = vset.pattern.permute.xlu0 8
        %447 = vperm.xlu0 %446, %v393
        %v448 = vpop.permute.xlu0 %447
        %451 = vset.pattern.permute.xlu0 8
        %452 = vperm.xlu0 %451, %v394
        %v453 = vpop.permute.xlu0 %452
        %456 = vset.pattern.permute.xlu0 8
        %457 = vperm.xlu0 %456, %v395
        %v458 = vpop.permute.xlu0 %457
        %461 = vset.pattern.permute.xlu0 8
        %462 = vperm.xlu0 %461, %v396
        %v463 = vpop.permute.xlu0 %462
        %466 = vset.pattern.permute.xlu0 8
        %467 = vperm.xlu0 %466, %v397
        %v468 = vpop.permute.xlu0 %467
        %471 = vset.pattern.permute.xlu0 8
        %472 = vperm.xlu0 %471, %v398
        %v473 = vpop.permute.xlu0 %472
        %476 = vset.pattern.permute.xlu0 8
        %477 = vperm.xlu0 %476, %v399
        %v478 = vpop.permute.xlu0 %477
        %481 = vset.pattern.permute.xlu0 8
        %482 = vperm.xlu0 %481, %v400
        %v483 = vpop.permute.xlu0 %482
        %486 = vset.pattern.permute.xlu0 8
        %487 = vperm.xlu0 %486, %v401
        %v488 = vpop.permute.xlu0 %487
        %491 = vset.pattern.permute.xlu0 8
        %492 = vperm.xlu0 %491, %v402
        %v493 = vpop.permute.xlu0 %492
        %496 = vset.pattern.permute.xlu0 8
        %497 = vperm.xlu0 %496, %v403
        %v498 = vpop.permute.xlu0 %497
        %501 = vset.pattern.permute.xlu0 8
        %502 = vperm.xlu0 %501, %v404
        %v503 = vpop.permute.xlu0 %502
        %506 = vset.pattern.permute.xlu0 8
        %507 = vperm.xlu0 %506, %v405
        %v508 = vpop.permute.xlu0 %507
        %511 = vset.pattern.permute.xlu0 8
        %512 = vperm.xlu0 %511, %v406
        %v513 = vpop.permute.xlu0 %512
        %516 = vset.pattern.permute.xlu0 8
        %517 = vperm.xlu0 %516, %v407
        %v518 = vpop.permute.xlu0 %517
        %521 = vset.pattern.permute.xlu0 8
        %522 = vperm.xlu0 %521, %v408
        %v523 = vpop.permute.xlu0 %522
        %526 = vset.pattern.permute.xlu0 8
        %527 = vperm.xlu0 %526, %v409
        %v528 = vpop.permute.xlu0 %527
        %531 = vset.pattern.permute.xlu0 8
        %532 = vperm.xlu0 %531, %v410
        %v533 = vpop.permute.xlu0 %532
        %536 = vset.pattern.permute.xlu0 8
        %537 = vperm.xlu0 %536, %v411
        %v538 = vpop.permute.xlu0 %537
        %541 = vset.pattern.permute.xlu0 8
        %542 = vperm.xlu0 %541, %v412
        %v543 = vpop.permute.xlu0 %542
        %546 = vset.pattern.permute.xlu0 8
        %547 = vperm.xlu0 %546, %v413
        %v548 = vpop.permute.xlu0 %547
        %551 = vset.pattern.permute.xlu0 8
        %552 = vperm.xlu0 %551, %v414
        %v553 = vpop.permute.xlu0 %552
        %556 = vset.pattern.permute.xlu0 8
        %557 = vperm.xlu0 %556, %v415
        %v558 = vpop.permute.xlu0 %557
        %561 = vset.pattern.permute.xlu0 8
        %562 = vperm.xlu0 %561, %v416
        %v563 = vpop.permute.xlu0 %562
        %566 = vset.pattern.permute.xlu0 8
        %567 = vperm.xlu0 %566, %v417
        %v568 = vpop.permute.xlu0 %567
        %571 = vset.pattern.permute.xlu0 8
        %572 = vperm.xlu0 %571, %v418
        %v573 = vpop.permute.xlu0 %572
        %576 = vset.pattern.permute.xlu0 8
        %577 = vperm.xlu0 %576, %v419
        %v578 = vpop.permute.xlu0 %577
        %v580 = vrcp.pop %v423
        %v581 = vmul.f32 %v356, %v580
        %v582 = vrcp.pop %v428
        %v583 = vmul.f32 %v357, %v582
        %v584 = vrcp.pop %v433
        %v585 = vmul.f32 %v358, %v584
        %v586 = vrcp.pop %v438
        %v587 = vmul.f32 %v359, %v586
        %v588 = vrcp.pop %v443
        %v589 = vmul.f32 %v360, %v588
        %v590 = vrcp.pop %v448
        %v591 = vmul.f32 %v361, %v590
        %v592 = vrcp.pop %v453
        %v593 = vmul.f32 %v362, %v592
        %v594 = vrcp.pop %v458
        %v595 = vmul.f32 %v363, %v594
        %v596 = vrcp.pop %v463
        %v597 = vmul.f32 %v364, %v596
        %v598 = vrcp.pop %v468
        %v599 = vmul.f32 %v365, %v598
        %v600 = vrcp.pop %v473
        %v601 = vmul.f32 %v366, %v600
        %v602 = vrcp.pop %v478
        %v603 = vmul.f32 %v367, %v602
        %v604 = vrcp.pop %v483
        %v605 = vmul.f32 %v368, %v604
        %v606 = vrcp.pop %v488
        %v607 = vmul.f32 %v369, %v606
        %v608 = vrcp.pop %v493
        %v609 = vmul.f32 %v370, %v608
        %v610 = vrcp.pop %v498
        %v611 = vmul.f32 %v371, %v610
        %v612 = vrcp.pop %v503
        %v613 = vmul.f32 %v372, %v612
        %v614 = vrcp.pop %v508
        %v615 = vmul.f32 %v373, %v614
        %v616 = vrcp.pop %v513
        %v617 = vmul.f32 %v374, %v616
        %v618 = vrcp.pop %v518
        %v619 = vmul.f32 %v375, %v618
        %v620 = vrcp.pop %v523
        %v621 = vmul.f32 %v376, %v620
        %v622 = vrcp.pop %v528
        %v623 = vmul.f32 %v377, %v622
        %v624 = vrcp.pop %v533
        %v625 = vmul.f32 %v378, %v624
        %v626 = vrcp.pop %v538
        %v627 = vmul.f32 %v379, %v626
        %v628 = vrcp.pop %v543
        %v629 = vmul.f32 %v380, %v628
        %v630 = vrcp.pop %v548
        %v631 = vmul.f32 %v381, %v630
        %v632 = vrcp.pop %v553
        %v633 = vmul.f32 %v382, %v632
        %v634 = vrcp.pop %v558
        %v635 = vmul.f32 %v383, %v634
        %v636 = vrcp.pop %v563
        %v637 = vmul.f32 %v384, %v636
        %v638 = vrcp.pop %v568
        %v639 = vmul.f32 %v385, %v638
        %v640 = vrcp.pop %v573
        %v641 = vmul.f32 %v386, %v640
        %v642 = vrcp.pop %v578
        %v643 = vmul.f32 %v387, %v642
        %v644 = vld [vmem:[%s211] sm:$0xff]
        %v645 = vld [vmem:[%s211 + $0x8] sm:$0xff]
        %v646 = vld [vmem:[%s211 + $0x10] sm:$0xff]
        %v647 = vld [vmem:[%s211 + $0x18] sm:$0xff]
        %v648 = vld [vmem:[%s211 + $0x20] sm:$0xff]
        %v649 = vld [vmem:[%s211 + $0x28] sm:$0xff]
        %v650 = vld [vmem:[%s211 + $0x30] sm:$0xff]
        %v651 = vld [vmem:[%s211 + $0x38] sm:$0xff]
        %v652 = vld [vmem:[%s211 + $0x40] sm:$0xff]
        %v653 = vld [vmem:[%s211 + $0x48] sm:$0xff]
        %v654 = vld [vmem:[%s211 + $0x50] sm:$0xff]
        %v655 = vld [vmem:[%s211 + $0x58] sm:$0xff]
        %v656 = vld [vmem:[%s211 + $0x60] sm:$0xff]
        %v657 = vld [vmem:[%s211 + $0x68] sm:$0xff]
        %v658 = vld [vmem:[%s211 + $0x70] sm:$0xff]
        %v659 = vld [vmem:[%s211 + $0x78] sm:$0xff]
        %v660 = vld [vmem:[%s211 + $0x80] sm:$0xff]
        %v661 = vld [vmem:[%s211 + $0x88] sm:$0xff]
        %v662 = vld [vmem:[%s211 + $0x90] sm:$0xff]
        %v663 = vld [vmem:[%s211 + $0x98] sm:$0xff]
        %v664 = vld [vmem:[%s211 + $0xa0] sm:$0xff]
        %v665 = vld [vmem:[%s211 + $0xa8] sm:$0xff]
        %v666 = vld [vmem:[%s211 + $0xb0] sm:$0xff]
        %v667 = vld [vmem:[%s211 + $0xb8] sm:$0xff]
        %v668 = vld [vmem:[%s211 + $0xc0] sm:$0xff]
        %v669 = vld [vmem:[%s211 + $0xc8] sm:$0xff]
        %v670 = vld [vmem:[%s211 + $0xd0] sm:$0xff]
        %v671 = vld [vmem:[%s211 + $0xd8] sm:$0xff]
        %v672 = vld [vmem:[%s211 + $0xe0] sm:$0xff]
        %v673 = vld [vmem:[%s211 + $0xe8] sm:$0xff]
        %v674 = vld [vmem:[%s211 + $0xf0] sm:$0xff]
        %v675 = vld [vmem:[%s211 + $0xf8] sm:$0xff]
        %v676 = vadd.f32 %v581, %v644
        %v677 = vadd.f32 %v583, %v645
        %v678 = vadd.f32 %v585, %v646
        %v679 = vadd.f32 %v587, %v647
        %v680 = vadd.f32 %v589, %v648
        %v681 = vadd.f32 %v591, %v649
        %v682 = vadd.f32 %v593, %v650
        %v683 = vadd.f32 %v595, %v651
        %v684 = vadd.f32 %v597, %v652
        %v685 = vadd.f32 %v599, %v653
        %v686 = vadd.f32 %v601, %v654
        %v687 = vadd.f32 %v603, %v655
        %v688 = vadd.f32 %v605, %v656
        %v689 = vadd.f32 %v607, %v657
        %v690 = vadd.f32 %v609, %v658
        %v691 = vadd.f32 %v611, %v659
        %v692 = vadd.f32 %v613, %v660
        %v693 = vadd.f32 %v615, %v661
        %v694 = vadd.f32 %v617, %v662
        %v695 = vadd.f32 %v619, %v663
        %v696 = vadd.f32 %v621, %v664
        %v697 = vadd.f32 %v623, %v665
        %v698 = vadd.f32 %v625, %v666
        %v699 = vadd.f32 %v627, %v667
        %v700 = vadd.f32 %v629, %v668
        %v701 = vadd.f32 %v631, %v669
        %v702 = vadd.f32 %v633, %v670
        %v703 = vadd.f32 %v635, %v671
        %v704 = vadd.f32 %v637, %v672
        %v705 = vadd.f32 %v639, %v673
        %v706 = vadd.f32 %v641, %v674
        %v707 = vadd.f32 %v643, %v675
        %vm708 = vcmask 64512
        %709 = vst.msk [vmem:[%s216] sm:$0xff] %vm708, %v676
        %710 = vst.msk [vmem:[%s216 + $0x8] sm:$0xff] %vm708, %v677
        %711 = vst.msk [vmem:[%s216 + $0x10] sm:$0xff] %vm708, %v678
        %712 = vst.msk [vmem:[%s216 + $0x18] sm:$0xff] %vm708, %v679
        %713 = vst.msk [vmem:[%s216 + $0x20] sm:$0xff] %vm708, %v680
        %714 = vst.msk [vmem:[%s216 + $0x28] sm:$0xff] %vm708, %v681
        %715 = vst.msk [vmem:[%s216 + $0x30] sm:$0xff] %vm708, %v682
        %716 = vst.msk [vmem:[%s216 + $0x38] sm:$0xff] %vm708, %v683
        %717 = vst.msk [vmem:[%s216 + $0x40] sm:$0xff] %vm708, %v684
        %718 = vst.msk [vmem:[%s216 + $0x48] sm:$0xff] %vm708, %v685
        %719 = vst.msk [vmem:[%s216 + $0x50] sm:$0xff] %vm708, %v686
        %720 = vst.msk [vmem:[%s216 + $0x58] sm:$0xff] %vm708, %v687
        %721 = vst.msk [vmem:[%s216 + $0x60] sm:$0xff] %vm708, %v688
        %722 = vst.msk [vmem:[%s216 + $0x68] sm:$0xff] %vm708, %v689
        %723 = vst.msk [vmem:[%s216 + $0x70] sm:$0xff] %vm708, %v690
        %724 = vst.msk [vmem:[%s216 + $0x78] sm:$0xff] %vm708, %v691
        %725 = vst.msk [vmem:[%s216 + $0x80] sm:$0xff] %vm708, %v692
        %726 = vst.msk [vmem:[%s216 + $0x88] sm:$0xff] %vm708, %v693
        %727 = vst.msk [vmem:[%s216 + $0x90] sm:$0xff] %vm708, %v694
        %728 = vst.msk [vmem:[%s216 + $0x98] sm:$0xff] %vm708, %v695
        %729 = vst.msk [vmem:[%s216 + $0xa0] sm:$0xff] %vm708, %v696
        %730 = vst.msk [vmem:[%s216 + $0xa8] sm:$0xff] %vm708, %v697
        %731 = vst.msk [vmem:[%s216 + $0xb0] sm:$0xff] %vm708, %v698
        %732 = vst.msk [vmem:[%s216 + $0xb8] sm:$0xff] %vm708, %v699
        %733 = vst.msk [vmem:[%s216 + $0xc0] sm:$0xff] %vm708, %v700
        %734 = vst.msk [vmem:[%s216 + $0xc8] sm:$0xff] %vm708, %v701
        %735 = vst.msk [vmem:[%s216 + $0xd0] sm:$0xff] %vm708, %v702
        %736 = vst.msk [vmem:[%s216 + $0xd8] sm:$0xff] %vm708, %v703
        %737 = vst.msk [vmem:[%s216 + $0xe0] sm:$0xff] %vm708, %v704
        %738 = vst.msk [vmem:[%s216 + $0xe8] sm:$0xff] %vm708, %v705
        %739 = vst.msk [vmem:[%s216 + $0xf0] sm:$0xff] %vm708, %v706
        %740 = vst.msk [vmem:[%s216 + $0xf8] sm:$0xff] %vm708, %v707
        %p741 = scmp.lt.s32.totalorder %s27, 1
        %s742 = scalar_select %p741, %s27, 1
        %s743 = smul.addr %s742, 32
        %s744 = smul.addr %s743, 8
        %s745 = scalar_lea.vmem %s5, %s744
        // Predicated region
        $region51: #{tree_filter_v2_forward.5} parent=31 // pred_check
          %p746 = pneg %p118
        $region52: #{tree_filter_v2_forward.5} parent=31 // pred_check_branch
          %748 = sbr.rel (%p746) target = $region54
        $region53: #{tree_filter_v2_forward.5} parent=31 // pred_region
          _
        $region54: #{tree_filter_v2_forward.5} parent=31 // pred_fallthru
          _
      $region32: #{tree_filter_v2_forward.5} parent=5 // pred_fallthru
        _
      %p749 = scmp.le.s32.totalorder 2, %s22
      // Predicated region
      $region55: #{tree_filter_v2_forward.5} parent=5 // pred_check
        %p750 = pneg %p749
      $region56: #{tree_filter_v2_forward.5} parent=5 // pred_check_branch
        %752 = sbr.rel (%p750) target = $region58
      $region57: #{tree_filter_v2_forward.5} parent=5 // pred_region
        %s753 = ssub.s32 %s22, 2
        // Predicated region
        $region59: #{tree_filter_v2_forward.5} parent=57 // pred_check
          %p754 = pneg %p124
        $region60: #{tree_filter_v2_forward.5} parent=57 // pred_check_branch
          %756 = sbr.rel (%p754) target = $region62
        $region61: #{tree_filter_v2_forward.5} parent=57 // pred_region
          %p757 = scmp.lt.s32.totalorder %s28, 1
          %s758 = scalar_select %p757, %s28, 1
          %s759 = smul.addr %s758, 32
          %s760 = smul.addr %s759, 8
          %s761 = scalar_lea.vmem %s5, %s760
        $region62: #{tree_filter_v2_forward.5} parent=57 // pred_fallthru
          _
      $region58: #{tree_filter_v2_forward.5} parent=5 // pred_fallthru
        _
    $region6: #{tree_filter_v2_forward.5} parent=1 // loop_footer
      %s26 = sadd.s32 1, %s22
    $region7: #{tree_filter_v2_forward.5} parent=1 // loop_footer_branch
      %21 = sbr.rel target = $region3
    $region8: #{tree_filter_v2_forward.5} parent=1 // loop_exit
      _
    %762 = vsyncpa [#allocation7], 1
    %s763 = scalar_lea.sflag [#allocation7], 1
    %764 = vsyncpa %s763, 1

</llo_original>
